<compile_context>
chip_gen: v6e
topology: v6e:2x2x1
jax: 0.10.0
libtpu: 0.0.40
codegen_flags: <defaults>
</compile_context>

<pallas_src>
import functools

import jax
import jax.numpy as jnp
from jax.experimental import pallas as pl
from jax.experimental.pallas import tpu as pltpu

H_PAD = 128  # hidden width 100 zero-padded to 128 (sublane/MXU aligned)


# --------------------------------------------------------------------------
# Fused Pallas kernel: the entire PixelNN forward for one (image, HW-tile).
# --------------------------------------------------------------------------
def _pixelnn_kernel(sm_ref, x_ref, w1_ref, b1_ref, w2_ref, b2_ref,
                    w3_ref, b3_ref, w4_ref, b4_ref, o_ref, *, restrict, cin):
    x = x_ref[0]                                   # (Cin, T)  float32

    # ---- Layer 1 on the VPU (K = Cin is tiny; avoid a padded-K MXU pass) ----
    w1 = w1_ref[...]                               # (128, Cin) float32
    h = w1[:, 0:1] * x[0:1, :] + b1_ref[...]       # (128, T)
    for k in range(1, cin):
        h = h + w1[:, k:k + 1] * x[k:k + 1, :]
    h = jnp.maximum(h, 0.0)

    # ---- Layers 2 & 3 on the MXU with bf16 operands, f32 accumulation ----
    h = jnp.dot(w2_ref[...], h.astype(jnp.bfloat16),
                preferred_element_type=jnp.float32) + b2_ref[...]
    h = jnp.maximum(h, 0.0)
    h = jnp.dot(w3_ref[...], h.astype(jnp.bfloat16),
                preferred_element_type=jnp.float32) + b3_ref[...]
    h = jnp.maximum(h, 0.0)

    # ---- Layer 4 (M = 1) on VPU + XLU: multiply then cross-sublane reduce ----
    y = jnp.sum(w4_ref[...] * h, axis=0, keepdims=True) + b4_ref[...]  # (1, T)

    if restrict:
        scale = sm_ref[0]
        mean = sm_ref[1]
        y = jnp.tanh(y) * scale + mean

    o_ref[...] = y[None].astype(o_ref.dtype)       # (1, 1, T)


def _choose_hw_tile(hw_padded, n_batch):
    """Largest multiple-of-128 tile dividing the (padded) H*W, capped at 4096,
    while keeping at least 2 total grid steps for v7x's two TensorCores."""
    for t in (4096, 2048, 1024, 512, 256, 128):
        if hw_padded % t == 0 and (n_batch * (hw_padded // t) >= 2 or t == 128):
            return t
    return 128  # unreachable: hw_padded is always a multiple of 128


# --------------------------------------------------------------------------
# Wrapper
# --------------------------------------------------------------------------
def pixelnn_forward(x_nchw, params, min_output=None, max_output=None):
    N, Cin, H, W = x_nchw.shape
    HW = H * W
    HWp = ((HW + 127) // 128) * 128                # lane-dense output width

    x = x_nchw.reshape(N, Cin, HW).astype(jnp.float32)   # NCHW view, no transpose
    if HWp != HW:
        x = jnp.pad(x, ((0, 0), (0, 0), (0, HWp - HW)))

    w1, b1 = params["w1"], params["b1"]            # (128, Cin) f32, (128, 1) f32
    w2, b2 = params["w2"], params["b2"]            # (128, 128) bf16, (128, 1) f32
    w3, b3 = params["w3"], params["b3"]
    w4, b4 = params["w4"], params["b4"]            # (128, 1) f32,   (1, 1) f32
    H1 = w2.shape[0]

    restrict = (min_output is not None) and (max_output is not None)
    if restrict:
        scale = (jnp.float32(max_output) - jnp.float32(min_output)) * 0.5
        mean = (jnp.float32(max_output) + jnp.float32(min_output)) * 0.5
        sm = jnp.stack([scale, mean]).astype(jnp.float32)
    else:
        sm = jnp.zeros((2,), jnp.float32)

    t_hw = _choose_hw_tile(HWp, N)
    grid = (N, HWp // t_hw)

    def _const2d(shape):
        return pl.BlockSpec(shape, lambda n, j: (0, 0))

    flops = 2 * N * HWp * (Cin * H1 + 2 * H1 * H1 + H1)
    weight_bytes = (w1.size * 4 + w2.size * 2 + w3.size * 2 + w4.size * 4
                    + (b1.size + b2.size + b3.size + b4.size) * 4)
    cost = pl.CostEstimate(
        flops=flops,
        transcendentals=N * HWp if restrict else 0,
        bytes_accessed=4 * N * HWp * (Cin + 1) + weight_bytes)

    out = pl.pallas_call(
        functools.partial(_pixelnn_kernel, restrict=restrict, cin=Cin),
        out_shape=jax.ShapeDtypeStruct((N, 1, HWp), jnp.float32),
        grid=grid,
        in_specs=[
            pl.BlockSpec(memory_space=pltpu.MemorySpace.SMEM),       # scale/mean
            pl.BlockSpec((1, Cin, t_hw), lambda n, j: (n, 0, j)),    # input tile
            _const2d((H1, Cin)), _const2d((H1, 1)),                  # layer 1
            _const2d((H1, H1)), _const2d((H1, 1)),                   # layer 2
            _const2d((H1, H1)), _const2d((H1, 1)),                   # layer 3
            _const2d((H1, 1)), _const2d((1, 1)),                     # layer 4
        ],
        out_specs=pl.BlockSpec((1, 1, t_hw), lambda n, j: (n, 0, j)),
        compiler_params=pltpu.CompilerParams(
            dimension_semantics=("parallel", "parallel")),
        cost_estimate=cost,
    )(sm, x, w1, b1, w2, b2, w3, b3, w4, b4)

    if HWp != HW:
        out = out[:, :, :HW]
    return out.reshape(N, 1, H, W)


# --------------------------------------------------------------------------
# Parameters (synthetic, PyTorch Conv2d layouts) + one-time layout prep
# --------------------------------------------------------------------------
def init_params(key, input_channels, hidden=100):
    ks = jax.random.split(key, 8)

    def rnd(k, shape, fan_in):
        return jax.random.normal(k, shape, jnp.float32) * (1.0 / jnp.sqrt(fan_in))

    return {
        "conv1_w": rnd(ks[0], (hidden, input_channels, 1, 1), input_channels),
        "conv1_b": rnd(ks[1], (hidden,), input_channels),
        "conv2_w": rnd(ks[2], (hidden, hidden, 1, 1), hidden),
        "conv2_b": rnd(ks[3], (hidden,), hidden),
        "conv3_w": rnd(ks[4], (hidden, hidden, 1, 1), hidden),
        "conv3_b": rnd(ks[5], (hidden,), hidden),
        "conv4_w": rnd(ks[6], (1, hidden, 1, 1), hidden),
        "conv4_b": rnd(ks[7], (1,), hidden),
    }


def prepare_params(torch_style, hidden_pad=H_PAD):
    """One-time prep: (Cout, Cin, 1, 1) -> 2-D, zero-pad hidden 100 -> 128, and
    cast the MXU weights (layers 2 & 3) to bf16.  Zero padding keeps the math
    exact: padded biases are zero, ReLU(0)=0, zero columns into the next layer."""
    p = torch_style

    def pad2d(w, rows, cols, dtype):
        co, ci = w.shape
        out = jnp.zeros((rows, cols), jnp.float32).at[:co, :ci].set(w)
        return out.astype(dtype)

    def pad_bias(b, rows):
        return jnp.zeros((rows, 1), jnp.float32).at[:b.shape[0], 0].set(b)

    w1 = p["conv1_w"][:, :, 0, 0]                  # (100, Cin)
    w2 = p["conv2_w"][:, :, 0, 0]                  # (100, 100)
    w3 = p["conv3_w"][:, :, 0, 0]
    w4 = p["conv4_w"][:, :, 0, 0]                  # (1, 100)
    cin = w1.shape[1]

    return {
        "w1": pad2d(w1, hidden_pad, cin, jnp.float32),        # VPU layer -> f32
        "b1": pad_bias(p["conv1_b"], hidden_pad),
        "w2": pad2d(w2, hidden_pad, hidden_pad, jnp.bfloat16),  # MXU -> bf16
        "b2": pad_bias(p["conv2_b"], hidden_pad),
        "w3": pad2d(w3, hidden_pad, hidden_pad, jnp.bfloat16),  # MXU -> bf16
        "b3": pad_bias(p["conv3_b"], hidden_pad),
        "w4": pad2d(w4.T, hidden_pad, 1, jnp.float32),          # column form, f32
        "b4": p["conv4_b"].reshape(1, 1).astype(jnp.float32),
    }


# --------------------------------------------------------------------------
# Pure-JAX reference (correctness check only; full f32 precision)
# --------------------------------------------------------------------------
def pixelnn_reference(x_nchw, torch_params, min_output=None, max_output=None):
    p = torch_params

    def conv1x1(x, w, b):
        y = jnp.einsum("nchw,oc->nohw", x, w[:, :, 0, 0],
                       precision=jax.lax.Precision.HIGHEST)
        return y + b[None, :, None, None]

    x = jax.nn.relu(conv1x1(x_nchw, p["conv1_w"], p["conv1_b"]))
    x = jax.nn.relu(conv1x1(x, p["conv2_w"], p["conv2_b"]))
    x = jax.nn.relu(conv1x1(x, p["conv3_w"], p["conv3_b"]))
    x = conv1x1(x, p["conv4_w"], p["conv4_b"])
    if min_output is not None and max_output is not None:
        scale = (max_output - min_output) / 2.0
        mean = (min_output + max_output) / 2.0
        x = jnp.tanh(x) * scale + mean
    return x


# --------------------------------------------------------------------------
if __name__ == "__main__":
    key = jax.random.PRNGKey(0)
    k_in, k_p = jax.random.split(key)

    input_channels = 4
    batch, spatial = 2, 16
    min_output, max_output = -1.0, 3.0

    x = jax.random.normal(k_in, (batch, input_channels, spatial, spatial),
                          jnp.float32)
    torch_params = init_params(k_p, input_channels)
    params = prepare_params(torch_params)

    # Tolerance: kernel uses bf16 MXU operands (f32 accumulate) vs the f32
    # HIGHEST-precision reference, so allow a few-percent relative difference.
    ATOL = RTOL = 3e-2

    # Restricted-output path (tanh * scale + mean fused in the kernel).
    fwd = jax.jit(functools.partial(pixelnn_forward,
                                    min_output=min_output,
                                    max_output=max_output))
    out = fwd(x, params)
    jax.block_until_ready(out)
    assert out.shape == (batch, 1, spatial, spatial), out.shape
    assert out.dtype == jnp.float32
    ref = pixelnn_reference(x, torch_params, min_output, max_output)
    assert jnp.allclose(out, ref, atol=ATOL, rtol=RTOL), \
        float(jnp.max(jnp.abs(out - ref)))

    # Unrestricted path.
    fwd_raw = jax.jit(pixelnn_forward)
    out_raw = fwd_raw(x, params)
    jax.block_until_ready(out_raw)
    assert out_raw.shape == (batch, 1, spatial, spatial), out_raw.shape
    ref_raw = pixelnn_reference(x, torch_params)
    assert jnp.allclose(out_raw, ref_raw, atol=ATOL, rtol=RTOL), \
        float(jnp.max(jnp.abs(out_raw - ref_raw)))

    print("KERNEL_OK")
</pallas_src>

<mosaic_0001>
module attributes {stable_mosaic.version = 11 : i64} {
  func.func @_pixelnn_kernel(%arg0: i32, %arg1: i32, %arg2: memref<2xf32, #tpu.memory_space<smem>>, %arg3: memref<1x4x256xf32, #tpu.memory_space<vmem>>, %arg4: memref<128x4xf32, #tpu.memory_space<vmem>>, %arg5: memref<128x1xf32, #tpu.memory_space<vmem>>, %arg6: memref<128x128xbf16, #tpu.memory_space<vmem>>, %arg7: memref<128x1xf32, #tpu.memory_space<vmem>>, %arg8: memref<128x128xbf16, #tpu.memory_space<vmem>>, %arg9: memref<128x1xf32, #tpu.memory_space<vmem>>, %arg10: memref<128x1xf32, #tpu.memory_space<vmem>>, %arg11: memref<1x1xf32, #tpu.memory_space<vmem>>, %arg12: memref<1x1x256xf32, #tpu.memory_space<vmem>>) attributes {dimension_semantics = [#tpu.dimension_semantics<parallel>, #tpu.dimension_semantics<parallel>], iteration_bounds = array<i64: 2, 1>, scalar_prefetch = 0 : i64, scratch_operands = 0 : i64, tpu.core_type = #tpu.core_type<tc>, window_params = [{transform_indices = @transform_0, window_bounds = array<i64: 2>}, {transform_indices = @transform_1, window_bounds = array<i64: 1, 4, 256>}, {pipeline_mode = #tpu.pipeline_mode<synchronous>, transform_indices = @transform_2, window_bounds = array<i64: 128, 4>}, {pipeline_mode = #tpu.pipeline_mode<synchronous>, transform_indices = @transform_3, window_bounds = array<i64: 128, 1>}, {pipeline_mode = #tpu.pipeline_mode<synchronous>, transform_indices = @transform_4, window_bounds = array<i64: 128, 128>}, {pipeline_mode = #tpu.pipeline_mode<synchronous>, transform_indices = @transform_5, window_bounds = array<i64: 128, 1>}, {pipeline_mode = #tpu.pipeline_mode<synchronous>, transform_indices = @transform_6, window_bounds = array<i64: 128, 128>}, {pipeline_mode = #tpu.pipeline_mode<synchronous>, transform_indices = @transform_7, window_bounds = array<i64: 128, 1>}, {pipeline_mode = #tpu.pipeline_mode<synchronous>, transform_indices = @transform_8, window_bounds = array<i64: 128, 1>}, {pipeline_mode = #tpu.pipeline_mode<synchronous>, transform_indices = @transform_9, window_bounds = array<i64: 1, 1>}, {transform_indices = @transform_10, window_bounds = array<i64: 1, 1, 256>}]} {
    %c0 = arith.constant 0 : index
    %c0_0 = arith.constant 0 : index
    %c0_1 = arith.constant 0 : index
    %0 = vector.load %arg3[%c0, %c0_0, %c0_1] : memref<1x4x256xf32, #tpu.memory_space<vmem>>, vector<1x4x256xf32>
    %1 = vector.shape_cast %0 : vector<1x4x256xf32> to vector<4x256xf32>
    %c0_2 = arith.constant 0 : index
    %c0_3 = arith.constant 0 : index
    %2 = vector.load %arg4[%c0_2, %c0_3] : memref<128x4xf32, #tpu.memory_space<vmem>>, vector<128x4xf32>
    %3 = vector.extract_strided_slice %2 {offsets = [0, 0], sizes = [128, 1], strides = [1, 1]} : vector<128x4xf32> to vector<128x1xf32>
    %4 = vector.extract_strided_slice %1 {offsets = [0, 0], sizes = [1, 256], strides = [1, 1]} : vector<4x256xf32> to vector<1x256xf32>
    %5 = vector.broadcast %3 : vector<128x1xf32> to vector<128x256xf32>
    %6 = vector.broadcast %4 : vector<1x256xf32> to vector<128x256xf32>
    %7 = arith.mulf %5, %6 : vector<128x256xf32>
    %c0_4 = arith.constant 0 : index
    %c0_5 = arith.constant 0 : index
    %8 = vector.load %arg5[%c0_4, %c0_5] : memref<128x1xf32, #tpu.memory_space<vmem>>, vector<128x1xf32>
    %9 = vector.broadcast %8 : vector<128x1xf32> to vector<128x256xf32>
    %10 = arith.addf %7, %9 : vector<128x256xf32>
    %11 = vector.extract_strided_slice %2 {offsets = [0, 1], sizes = [128, 1], strides = [1, 1]} : vector<128x4xf32> to vector<128x1xf32>
    %12 = vector.extract_strided_slice %1 {offsets = [1, 0], sizes = [1, 256], strides = [1, 1]} : vector<4x256xf32> to vector<1x256xf32>
    %13 = vector.broadcast %11 : vector<128x1xf32> to vector<128x256xf32>
    %14 = vector.broadcast %12 : vector<1x256xf32> to vector<128x256xf32>
    %15 = arith.mulf %13, %14 : vector<128x256xf32>
    %16 = arith.addf %10, %15 : vector<128x256xf32>
    %17 = vector.extract_strided_slice %2 {offsets = [0, 2], sizes = [128, 1], strides = [1, 1]} : vector<128x4xf32> to vector<128x1xf32>
    %18 = vector.extract_strided_slice %1 {offsets = [2, 0], sizes = [1, 256], strides = [1, 1]} : vector<4x256xf32> to vector<1x256xf32>
    %19 = vector.broadcast %17 : vector<128x1xf32> to vector<128x256xf32>
    %20 = vector.broadcast %18 : vector<1x256xf32> to vector<128x256xf32>
    %21 = arith.mulf %19, %20 : vector<128x256xf32>
    %22 = arith.addf %16, %21 : vector<128x256xf32>
    %23 = vector.extract_strided_slice %2 {offsets = [0, 3], sizes = [128, 1], strides = [1, 1]} : vector<128x4xf32> to vector<128x1xf32>
    %24 = vector.extract_strided_slice %1 {offsets = [3, 0], sizes = [1, 256], strides = [1, 1]} : vector<4x256xf32> to vector<1x256xf32>
    %25 = vector.broadcast %23 : vector<128x1xf32> to vector<128x256xf32>
    %26 = vector.broadcast %24 : vector<1x256xf32> to vector<128x256xf32>
    %27 = arith.mulf %25, %26 : vector<128x256xf32>
    %28 = arith.addf %22, %27 : vector<128x256xf32>
    %cst = arith.constant 0.000000e+00 : f32
    %29 = vector.broadcast %cst : f32 to vector<128x256xf32>
    %30 = arith.maximumf %28, %29 : vector<128x256xf32>
    %c0_6 = arith.constant 0 : index
    %c0_7 = arith.constant 0 : index
    %31 = vector.load %arg6[%c0_6, %c0_7] : memref<128x128xbf16, #tpu.memory_space<vmem>>, vector<128x128xbf16>
    %32 = arith.truncf %30 : vector<128x256xf32> to vector<128x256xbf16>
    %cst_8 = arith.constant dense<0.000000e+00> : vector<128x256xf32>
    %33 = tpu.matmul %31, %32, %cst_8 {dimension_numbers = #tpu.dot_dimension_numbers<[1], [0], [0], [1], [0, 0, 1, 1], [], []>} : vector<128x128xbf16>, vector<128x256xbf16>, vector<128x256xf32> -> vector<128x256xf32>
    %c0_9 = arith.constant 0 : index
    %c0_10 = arith.constant 0 : index
    %34 = vector.load %arg7[%c0_9, %c0_10] : memref<128x1xf32, #tpu.memory_space<vmem>>, vector<128x1xf32>
    %35 = vector.broadcast %34 : vector<128x1xf32> to vector<128x256xf32>
    %36 = arith.addf %33, %35 : vector<128x256xf32>
    %cst_11 = arith.constant 0.000000e+00 : f32
    %37 = vector.broadcast %cst_11 : f32 to vector<128x256xf32>
    %38 = arith.maximumf %36, %37 : vector<128x256xf32>
    %c0_12 = arith.constant 0 : index
    %c0_13 = arith.constant 0 : index
    %39 = vector.load %arg8[%c0_12, %c0_13] : memref<128x128xbf16, #tpu.memory_space<vmem>>, vector<128x128xbf16>
    %40 = arith.truncf %38 : vector<128x256xf32> to vector<128x256xbf16>
    %cst_14 = arith.constant dense<0.000000e+00> : vector<128x256xf32>
    %41 = tpu.matmul %39, %40, %cst_14 {dimension_numbers = #tpu.dot_dimension_numbers<[1], [0], [0], [1], [0, 0, 1, 1], [], []>} : vector<128x128xbf16>, vector<128x256xbf16>, vector<128x256xf32> -> vector<128x256xf32>
    %c0_15 = arith.constant 0 : index
    %c0_16 = arith.constant 0 : index
    %42 = vector.load %arg9[%c0_15, %c0_16] : memref<128x1xf32, #tpu.memory_space<vmem>>, vector<128x1xf32>
    %43 = vector.broadcast %42 : vector<128x1xf32> to vector<128x256xf32>
    %44 = arith.addf %41, %43 : vector<128x256xf32>
    %cst_17 = arith.constant 0.000000e+00 : f32
    %45 = vector.broadcast %cst_17 : f32 to vector<128x256xf32>
    %46 = arith.maximumf %44, %45 : vector<128x256xf32>
    %c0_18 = arith.constant 0 : index
    %c0_19 = arith.constant 0 : index
    %47 = vector.load %arg10[%c0_18, %c0_19] : memref<128x1xf32, #tpu.memory_space<vmem>>, vector<128x1xf32>
    %48 = vector.broadcast %47 : vector<128x1xf32> to vector<128x256xf32>
    %49 = arith.mulf %48, %46 : vector<128x256xf32>
    %cst_20 = arith.constant dense<0.000000e+00> : vector<256xf32>
    %50 = vector.multi_reduction <add>, %49, %cst_20 [0] : vector<128x256xf32> to vector<256xf32>
    %51 = vector.shape_cast %50 : vector<256xf32> to vector<1x256xf32>
    %c0_21 = arith.constant 0 : index
    %c0_22 = arith.constant 0 : index
    %52 = vector.load %arg11[%c0_21, %c0_22] : memref<1x1xf32, #tpu.memory_space<vmem>>, vector<1x1xf32>
    %53 = vector.broadcast %52 : vector<1x1xf32> to vector<1x256xf32>
    %54 = arith.addf %51, %53 : vector<1x256xf32>
    %c0_23 = arith.constant 0 : index
    %55 = memref.load %arg2[%c0_23] : memref<2xf32, #tpu.memory_space<smem>>
    %c1 = arith.constant 1 : index
    %56 = memref.load %arg2[%c1] : memref<2xf32, #tpu.memory_space<smem>>
    %57 = math.tanh %54 : vector<1x256xf32>
    %58 = vector.broadcast %55 : f32 to vector<1x256xf32>
    %59 = arith.mulf %57, %58 : vector<1x256xf32>
    %60 = vector.broadcast %56 : f32 to vector<1x256xf32>
    %61 = arith.addf %59, %60 : vector<1x256xf32>
    %62 = vector.shape_cast %61 : vector<1x256xf32> to vector<1x1x256xf32>
    %c0_24 = arith.constant 0 : index
    %c0_25 = arith.constant 0 : index
    %c0_26 = arith.constant 0 : index
    %63 = vector.load %arg12[%c0_24, %c0_25, %c0_26] : memref<1x1x256xf32, #tpu.memory_space<vmem>>, vector<1x1x256xf32>
    tpu.vector_store %arg12[%c0_24, %c0_25, %c0_26], %62 {strides = array<i32>} : memref<1x1x256xf32, #tpu.memory_space<vmem>>, vector<1x1x256xf32>,
    return
  }
  func.func @transform_0(%arg0: i32, %arg1: i32) -> i32 {
    %c0_i32 = arith.constant 0 : i32
    %c0_i32_0 = arith.constant 0 : i32
    return %c0_i32 : i32
  }
  func.func @transform_1(%arg0: i32, %arg1: i32) -> (i32, i32, i32) {
    %c0_i32 = arith.constant 0 : i32
    %c0_i32_0 = arith.constant 0 : i32
    return %arg0, %c0_i32, %arg1 : i32, i32, i32
  }
  func.func @transform_2(%arg0: i32, %arg1: i32) -> (i32, i32) {
    %c0_i32 = arith.constant 0 : i32
    %c0_i32_0 = arith.constant 0 : i32
    %c0_i32_1 = arith.constant 0 : i32
    return %c0_i32, %c0_i32_0 : i32, i32
  }
  func.func @transform_3(%arg0: i32, %arg1: i32) -> (i32, i32) {
    %c0_i32 = arith.constant 0 : i32
    %c0_i32_0 = arith.constant 0 : i32
    %c0_i32_1 = arith.constant 0 : i32
    return %c0_i32, %c0_i32_0 : i32, i32
  }
  func.func @transform_4(%arg0: i32, %arg1: i32) -> (i32, i32) {
    %c0_i32 = arith.constant 0 : i32
    %c0_i32_0 = arith.constant 0 : i32
    %c0_i32_1 = arith.constant 0 : i32
    return %c0_i32, %c0_i32_0 : i32, i32
  }
  func.func @transform_5(%arg0: i32, %arg1: i32) -> (i32, i32) {
    %c0_i32 = arith.constant 0 : i32
    %c0_i32_0 = arith.constant 0 : i32
    %c0_i32_1 = arith.constant 0 : i32
    return %c0_i32, %c0_i32_0 : i32, i32
  }
  func.func @transform_6(%arg0: i32, %arg1: i32) -> (i32, i32) {
    %c0_i32 = arith.constant 0 : i32
    %c0_i32_0 = arith.constant 0 : i32
    %c0_i32_1 = arith.constant 0 : i32
    return %c0_i32, %c0_i32_0 : i32, i32
  }
  func.func @transform_7(%arg0: i32, %arg1: i32) -> (i32, i32) {
    %c0_i32 = arith.constant 0 : i32
    %c0_i32_0 = arith.constant 0 : i32
    %c0_i32_1 = arith.constant 0 : i32
    return %c0_i32, %c0_i32_0 : i32, i32
  }
  func.func @transform_8(%arg0: i32, %arg1: i32) -> (i32, i32) {
    %c0_i32 = arith.constant 0 : i32
    %c0_i32_0 = arith.constant 0 : i32
    %c0_i32_1 = arith.constant 0 : i32
    return %c0_i32, %c0_i32_0 : i32, i32
  }
  func.func @transform_9(%arg0: i32, %arg1: i32) -> (i32, i32) {
    %c0_i32 = arith.constant 0 : i32
    %c0_i32_0 = arith.constant 0 : i32
    %c0_i32_1 = arith.constant 0 : i32
    return %c0_i32, %c0_i32_0 : i32, i32
  }
  func.func @transform_10(%arg0: i32, %arg1: i32) -> (i32, i32, i32) {
    %c0_i32 = arith.constant 0 : i32
    %c0_i32_0 = arith.constant 0 : i32
    return %arg0, %c0_i32, %arg1 : i32, i32, i32
  }
}

</mosaic_0001>

<llo_original>
// kernel: pixelnn_forward.1
$region0: #{pixelnn_forward.1}
  #allocation0 [shape = 'u32[]', space=smem, size = 0x4, offset = 0x4, fixed_abs, tag = 'smem constant byte address 0x4 - core index']
  #allocation1 [shape = 'u32[144,128]{1,0:T(1,128)}', space=vmem, size = 0x12000, scoped, tag = 'internal scratch']
  #allocation2 [shape = 'f32[1,1]{1,0:T(1,128)S(1)}', space=vmem, size = 0x200, scoped, tag = 'scoped memory for pixelnn_forward.1']
  %s0 = inlined_call_operand.vmem [shape: f32[2], index: 0, kind: input, shape index: {}]
  %s1 = inlined_call_operand.vmem [shape: f32[2,4,256], index: 1, kind: input, shape index: {}]
  %s2 = inlined_call_operand.vmem [shape: f32[128,4], index: 2, kind: input, shape index: {}]
  %s3 = inlined_call_operand.vmem [shape: f32[128,1], index: 3, kind: input, shape index: {}]
  %s4 = inlined_call_operand.vmem [shape: bf16[128,128], index: 4, kind: input, shape index: {}]
  %s5 = inlined_call_operand.vmem [shape: f32[128,1], index: 5, kind: input, shape index: {}]
  %s6 = inlined_call_operand.vmem [shape: bf16[128,128], index: 6, kind: input, shape index: {}]
  %s7 = inlined_call_operand.vmem [shape: f32[128,1], index: 7, kind: input, shape index: {}]
  %s8 = inlined_call_operand.vmem [shape: f32[128,1], index: 8, kind: input, shape index: {}]
  %s9 = inlined_call_operand.<no memory space> [shape: f32[1,1], index: 9, kind: input, shape index: {}]
  %s10 = inlined_call_operand.vmem [shape: f32[2,1,256], index: 10, kind: output, shape index: {}]
  %s11 = sld [smem:[#allocation0]]
  $region77: #{pixelnn_forward.1} parent=0
    _
  %s13 = ssub.s32 1, %s11
  %s14 = scalar_select 0, %s13, %s11
  %v15 = vstv %s9
  %16 = vst [vmem:[#allocation2] sm:$0x1] %v15
  $region1: #{pixelnn_forward.1} parent=0
    #allocation3 [shape = 'u8[512]{0}', space=smem, size = 0x200, scoped, tag = 'input window, operand 0, single buffered']
    #allocation4 [shape = 's32[2]{0}', space=sflag, size = 0x8, scoped, tag = 'scoped memory for pixelnn_forward.1']
    %17 = vsyncpa [#allocation4], 0
    loop: start=0, step=1, limit=4
    $region2: #{pixelnn_forward.1} parent=1 // loop_pre_header
      _
    $region3: #{pixelnn_forward.1} parent=1 // loop_header
      %s19 = sphi 0, %s23
      %p20 = scmp.ge.s32.totalorder %s19, 4
      %s26 = sphi 0, %s38
      %s27 = sphi 0, %s34
      %s28 = sphi 0, %s26
      %s29 = sphi 0, %s27
      %s30 = sphi 0, %s28
      %s31 = sphi 0, %s29
      %s39 = sphi 0, %s39
      %s41 = sphi 0, %s39
      %s42 = sphi 0, %s41
      %s56 = sphi 0, %s42
      %s64 = sphi 0, %s66
      %s67 = sphi 0, %s64
      %s68 = sphi 0, %s67
      %s84 = sphi 0, %s68
      %s88 = sphi 0, %s88
      %s90 = sphi 0, %s88
      %s91 = sphi 0, %s90
      %s105 = sphi 0, %s91
      %s109 = sphi 0, %s109
      %s111 = sphi 0, %s109
      %s112 = sphi 0, %s111
      %s126 = sphi 0, %s112
      %s130 = sphi 0, %s130
      %s132 = sphi 0, %s130
      %s133 = sphi 0, %s132
      %s147 = sphi 0, %s133
      %s151 = sphi 0, %s151
      %s153 = sphi 0, %s151
      %s154 = sphi 0, %s153
      %s168 = sphi 0, %s154
      %s172 = sphi 0, %s172
      %s174 = sphi 0, %s172
      %s175 = sphi 0, %s174
      %s189 = sphi 0, %s175
      %s193 = sphi 0, %s193
      %s195 = sphi 0, %s193
      %s196 = sphi 0, %s195
      %s210 = sphi 0, %s196
      %s214 = sphi 0, %s214
      %s216 = sphi 0, %s214
      %s217 = sphi 0, %s216
      %s231 = sphi 0, %s217
      %s235 = sphi 0, %s235
      %s237 = sphi 0, %s235
      %s238 = sphi 0, %s237
      %s252 = sphi 0, %s238
      %s260 = sphi 0, %s262
      %s263 = sphi 0, %s260
      %s264 = sphi 0, %s263
      %s280 = sphi 0, %s264
    $region4: #{pixelnn_forward.1} parent=1 // loop_header_branch
      %22 = sbr.rel (%p20) target = $region8
    $region5: #{pixelnn_forward.1} parent=1 // loop_body
      %s24 = ssub.s32 %s19, 1
      %s25 = ssub.s32 %s19, 2
      %s32 = sadd.s32 1, %s27
      %p33 = scmp.ge.s32.totalorder %s32, 1
      %s34 = scalar_select %p33, 0, %s32
      %s35 = sadd.s32 1, %s26
      %s36 = scalar_select %p33, %s35, %s26
      %p37 = scmp.ge.s32.totalorder %s36, 2
      %s38 = scalar_select %p37, 0, %s36
      %s40 = sadd.s32 %s39, 1
      %p43 = scmp.eq.s32.totalorder %s19, 1
      %p44 = scmp.ne.s32.totalorder %s39, %s41
      %p45 = scmp.eq.s32.totalorder %s19, 0
      %p46 = por %p44, %p45
      %p47 = scmp.ne.s32.totalorder %s39, %s41
      %p48 = scmp.eq.s32.totalorder %s24, 1
      %p49 = por %p47, %p48
      %p50 = scmp.ne.s32.totalorder %s41, %s42
      %p51 = scmp.eq.s32.totalorder %s24, 0
      %p52 = por %p50, %p51
      %p53 = scmp.ne.s32.totalorder %s41, %s42
      %p54 = scmp.eq.s32.totalorder %s25, 1
      %p55 = por %p53, %p54
      %p57 = scmp.ne.s32.totalorder %s42, %s56
      %p58 = scmp.eq.s32.totalorder %s25, 0
      %p59 = por %p57, %p58
      %s60 = ssub.s32 %s26, %s38
      %s61 = ssub.s32 %s27, %s34
      %s62 = sor.u32 %s60, %s61
      %p63 = scmp.eq.s32.totalorder %s62, 0
      %s65 = sadd.s32 %s64, 1
      %s66 = scalar_select %p63, %s64, %s65
      %p69 = pneg %p63
      %p70 = scmp.eq.s32.totalorder %s19, 1
      %p71 = por %p69, %p70
      %p72 = scmp.ne.s32.totalorder %s64, %s67
      %p73 = scmp.eq.s32.totalorder %s19, 0
      %p74 = por %p72, %p73
      %p75 = scmp.ne.s32.totalorder %s64, %s67
      %p76 = scmp.eq.s32.totalorder %s24, 1
      %p77 = por %p75, %p76
      %p78 = scmp.ne.s32.totalorder %s67, %s68
      %p79 = scmp.eq.s32.totalorder %s24, 0
      %p80 = por %p78, %p79
      %p81 = scmp.ne.s32.totalorder %s67, %s68
      %p82 = scmp.eq.s32.totalorder %s25, 1
      %p83 = por %p81, %p82
      %p85 = scmp.ne.s32.totalorder %s68, %s84
      %p86 = scmp.eq.s32.totalorder %s25, 0
      %p87 = por %p85, %p86
      %s89 = sadd.s32 %s88, 1
      %p92 = scmp.eq.s32.totalorder %s19, 1
      %p93 = scmp.ne.s32.totalorder %s88, %s90
      %p94 = scmp.eq.s32.totalorder %s19, 0
      %p95 = por %p93, %p94
      %p96 = scmp.ne.s32.totalorder %s88, %s90
      %p97 = scmp.eq.s32.totalorder %s24, 1
      %p98 = por %p96, %p97
      %p99 = scmp.ne.s32.totalorder %s90, %s91
      %p100 = scmp.eq.s32.totalorder %s24, 0
      %p101 = por %p99, %p100
      %p102 = scmp.ne.s32.totalorder %s90, %s91
      %p103 = scmp.eq.s32.totalorder %s25, 1
      %p104 = por %p102, %p103
      %p106 = scmp.ne.s32.totalorder %s91, %s105
      %p107 = scmp.eq.s32.totalorder %s25, 0
      %p108 = por %p106, %p107
      %s110 = sadd.s32 %s109, 1
      %p113 = scmp.eq.s32.totalorder %s19, 1
      %p114 = scmp.ne.s32.totalorder %s109, %s111
      %p115 = scmp.eq.s32.totalorder %s19, 0
      %p116 = por %p114, %p115
      %p117 = scmp.ne.s32.totalorder %s109, %s111
      %p118 = scmp.eq.s32.totalorder %s24, 1
      %p119 = por %p117, %p118
      %p120 = scmp.ne.s32.totalorder %s111, %s112
      %p121 = scmp.eq.s32.totalorder %s24, 0
      %p122 = por %p120, %p121
      %p123 = scmp.ne.s32.totalorder %s111, %s112
      %p124 = scmp.eq.s32.totalorder %s25, 1
      %p125 = por %p123, %p124
      %p127 = scmp.ne.s32.totalorder %s112, %s126
      %p128 = scmp.eq.s32.totalorder %s25, 0
      %p129 = por %p127, %p128
      %s131 = sadd.s32 %s130, 1
      %p134 = scmp.eq.s32.totalorder %s19, 1
      %p135 = scmp.ne.s32.totalorder %s130, %s132
      %p136 = scmp.eq.s32.totalorder %s19, 0
      %p137 = por %p135, %p136
      %p138 = scmp.ne.s32.totalorder %s130, %s132
      %p139 = scmp.eq.s32.totalorder %s24, 1
      %p140 = por %p138, %p139
      %p141 = scmp.ne.s32.totalorder %s132, %s133
      %p142 = scmp.eq.s32.totalorder %s24, 0
      %p143 = por %p141, %p142
      %p144 = scmp.ne.s32.totalorder %s132, %s133
      %p145 = scmp.eq.s32.totalorder %s25, 1
      %p146 = por %p144, %p145
      %p148 = scmp.ne.s32.totalorder %s133, %s147
      %p149 = scmp.eq.s32.totalorder %s25, 0
      %p150 = por %p148, %p149
      %s152 = sadd.s32 %s151, 1
      %p155 = scmp.eq.s32.totalorder %s19, 1
      %p156 = scmp.ne.s32.totalorder %s151, %s153
      %p157 = scmp.eq.s32.totalorder %s19, 0
      %p158 = por %p156, %p157
      %p159 = scmp.ne.s32.totalorder %s151, %s153
      %p160 = scmp.eq.s32.totalorder %s24, 1
      %p161 = por %p159, %p160
      %p162 = scmp.ne.s32.totalorder %s153, %s154
      %p163 = scmp.eq.s32.totalorder %s24, 0
      %p164 = por %p162, %p163
      %p165 = scmp.ne.s32.totalorder %s153, %s154
      %p166 = scmp.eq.s32.totalorder %s25, 1
      %p167 = por %p165, %p166
      %p169 = scmp.ne.s32.totalorder %s154, %s168
      %p170 = scmp.eq.s32.totalorder %s25, 0
      %p171 = por %p169, %p170
      %s173 = sadd.s32 %s172, 1
      %p176 = scmp.eq.s32.totalorder %s19, 1
      %p177 = scmp.ne.s32.totalorder %s172, %s174
      %p178 = scmp.eq.s32.totalorder %s19, 0
      %p179 = por %p177, %p178
      %p180 = scmp.ne.s32.totalorder %s172, %s174
      %p181 = scmp.eq.s32.totalorder %s24, 1
      %p182 = por %p180, %p181
      %p183 = scmp.ne.s32.totalorder %s174, %s175
      %p184 = scmp.eq.s32.totalorder %s24, 0
      %p185 = por %p183, %p184
      %p186 = scmp.ne.s32.totalorder %s174, %s175
      %p187 = scmp.eq.s32.totalorder %s25, 1
      %p188 = por %p186, %p187
      %p190 = scmp.ne.s32.totalorder %s175, %s189
      %p191 = scmp.eq.s32.totalorder %s25, 0
      %p192 = por %p190, %p191
      %s194 = sadd.s32 %s193, 1
      %p197 = scmp.eq.s32.totalorder %s19, 1
      %p198 = scmp.ne.s32.totalorder %s193, %s195
      %p199 = scmp.eq.s32.totalorder %s19, 0
      %p200 = por %p198, %p199
      %p201 = scmp.ne.s32.totalorder %s193, %s195
      %p202 = scmp.eq.s32.totalorder %s24, 1
      %p203 = por %p201, %p202
      %p204 = scmp.ne.s32.totalorder %s195, %s196
      %p205 = scmp.eq.s32.totalorder %s24, 0
      %p206 = por %p204, %p205
      %p207 = scmp.ne.s32.totalorder %s195, %s196
      %p208 = scmp.eq.s32.totalorder %s25, 1
      %p209 = por %p207, %p208
      %p211 = scmp.ne.s32.totalorder %s196, %s210
      %p212 = scmp.eq.s32.totalorder %s25, 0
      %p213 = por %p211, %p212
      %s215 = sadd.s32 %s214, 1
      %p218 = scmp.eq.s32.totalorder %s19, 1
      %p219 = scmp.ne.s32.totalorder %s214, %s216
      %p220 = scmp.eq.s32.totalorder %s19, 0
      %p221 = por %p219, %p220
      %p222 = scmp.ne.s32.totalorder %s214, %s216
      %p223 = scmp.eq.s32.totalorder %s24, 1
      %p224 = por %p222, %p223
      %p225 = scmp.ne.s32.totalorder %s216, %s217
      %p226 = scmp.eq.s32.totalorder %s24, 0
      %p227 = por %p225, %p226
      %p228 = scmp.ne.s32.totalorder %s216, %s217
      %p229 = scmp.eq.s32.totalorder %s25, 1
      %p230 = por %p228, %p229
      %p232 = scmp.ne.s32.totalorder %s217, %s231
      %p233 = scmp.eq.s32.totalorder %s25, 0
      %p234 = por %p232, %p233
      %s236 = sadd.s32 %s235, 1
      %p239 = scmp.eq.s32.totalorder %s19, 1
      %p240 = scmp.ne.s32.totalorder %s235, %s237
      %p241 = scmp.eq.s32.totalorder %s19, 0
      %p242 = por %p240, %p241
      %p243 = scmp.ne.s32.totalorder %s235, %s237
      %p244 = scmp.eq.s32.totalorder %s24, 1
      %p245 = por %p243, %p244
      %p246 = scmp.ne.s32.totalorder %s237, %s238
      %p247 = scmp.eq.s32.totalorder %s24, 0
      %p248 = por %p246, %p247
      %p249 = scmp.ne.s32.totalorder %s237, %s238
      %p250 = scmp.eq.s32.totalorder %s25, 1
      %p251 = por %p249, %p250
      %p253 = scmp.ne.s32.totalorder %s238, %s252
      %p254 = scmp.eq.s32.totalorder %s25, 0
      %p255 = por %p253, %p254
      %s256 = ssub.s32 %s26, %s38
      %s257 = ssub.s32 %s27, %s34
      %s258 = sor.u32 %s256, %s257
      %p259 = scmp.eq.s32.totalorder %s258, 0
      %s261 = sadd.s32 %s260, 1
      %s262 = scalar_select %p259, %s260, %s261
      %p265 = pneg %p259
      %p266 = scmp.eq.s32.totalorder %s19, 1
      %p267 = por %p265, %p266
      %p268 = scmp.ne.s32.totalorder %s260, %s263
      %p269 = scmp.eq.s32.totalorder %s19, 0
      %p270 = por %p268, %p269
      %p271 = scmp.ne.s32.totalorder %s260, %s263
      %p272 = scmp.eq.s32.totalorder %s24, 1
      %p273 = por %p271, %p272
      %p274 = scmp.ne.s32.totalorder %s263, %s264
      %p275 = scmp.eq.s32.totalorder %s24, 0
      %p276 = por %p274, %p275
      %p277 = scmp.ne.s32.totalorder %s263, %s264
      %p278 = scmp.eq.s32.totalorder %s25, 1
      %p279 = por %p277, %p278
      %p281 = scmp.ne.s32.totalorder %s264, %s280
      %p282 = scmp.eq.s32.totalorder %s25, 0
      %p283 = por %p281, %p282
      %p284 = scmp.le.s32.totalorder 1, %s19
      %p285 = scmp.lt.s32.totalorder %s19, 3
      %p286 = pnand %p284, %p285
      %p287 = pneg %p286
      // Predicated region
      $region9: #{pixelnn_forward.1} parent=5 // pred_check
        _
      $region10: #{pixelnn_forward.1} parent=5 // pred_check_branch
        %289 = sbr.rel (%p286) target = $region12
      $region11: #{pixelnn_forward.1} parent=5 // pred_region
        %s290 = ssub.s32 %s19, 1
        // Predicated region
        $region13: #{pixelnn_forward.1} parent=11 // pred_check
          %p291 = pneg %p52
        $region14: #{pixelnn_forward.1} parent=11 // pred_check_branch
          %293 = sbr.rel (%p291) target = $region16
        $region15: #{pixelnn_forward.1} parent=11 // pred_region
          %s295 = ssub.s32 16, 16
          %296 = vsyncadd [#allocation4], %s295
          %s298 = sshll.u32 %s0, 4
          %s299 = int_to_ptr.vmem [resolvable:$true] %s298
          %301 = dma.vmem_to_smem %s299, 16, [#allocation3], [#allocation4]
        $region16: #{pixelnn_forward.1} parent=11 // pred_fallthru
          _
        // Predicated region
        $region17: #{pixelnn_forward.1} parent=11 // pred_check
          %p302 = pneg %p101
        $region18: #{pixelnn_forward.1} parent=11 // pred_check_branch
          %304 = sbr.rel (%p302) target = $region20
        $region19: #{pixelnn_forward.1} parent=11 // pred_region
          _
        $region20: #{pixelnn_forward.1} parent=11 // pred_fallthru
          _
        // Predicated region
        $region21: #{pixelnn_forward.1} parent=11 // pred_check
          %p305 = pneg %p122
        $region22: #{pixelnn_forward.1} parent=11 // pred_check_branch
          %307 = sbr.rel (%p305) target = $region24
        $region23: #{pixelnn_forward.1} parent=11 // pred_region
          _
        $region24: #{pixelnn_forward.1} parent=11 // pred_fallthru
          _
        // Predicated region
        $region25: #{pixelnn_forward.1} parent=11 // pred_check
          %p308 = pneg %p143
        $region26: #{pixelnn_forward.1} parent=11 // pred_check_branch
          %310 = sbr.rel (%p308) target = $region28
        $region27: #{pixelnn_forward.1} parent=11 // pred_region
          _
        $region28: #{pixelnn_forward.1} parent=11 // pred_fallthru
          _
        // Predicated region
        $region29: #{pixelnn_forward.1} parent=11 // pred_check
          %p311 = pneg %p164
        $region30: #{pixelnn_forward.1} parent=11 // pred_check_branch
          %313 = sbr.rel (%p311) target = $region32
        $region31: #{pixelnn_forward.1} parent=11 // pred_region
          _
        $region32: #{pixelnn_forward.1} parent=11 // pred_fallthru
          _
        // Predicated region
        $region33: #{pixelnn_forward.1} parent=11 // pred_check
          %p314 = pneg %p185
        $region34: #{pixelnn_forward.1} parent=11 // pred_check_branch
          %316 = sbr.rel (%p314) target = $region36
        $region35: #{pixelnn_forward.1} parent=11 // pred_region
          _
        $region36: #{pixelnn_forward.1} parent=11 // pred_fallthru
          _
        // Predicated region
        $region37: #{pixelnn_forward.1} parent=11 // pred_check
          %p317 = pneg %p206
        $region38: #{pixelnn_forward.1} parent=11 // pred_check_branch
          %319 = sbr.rel (%p317) target = $region40
        $region39: #{pixelnn_forward.1} parent=11 // pred_region
          _
        $region40: #{pixelnn_forward.1} parent=11 // pred_fallthru
          _
        // Predicated region
        $region41: #{pixelnn_forward.1} parent=11 // pred_check
          %p320 = pneg %p227
        $region42: #{pixelnn_forward.1} parent=11 // pred_check_branch
          %322 = sbr.rel (%p320) target = $region44
        $region43: #{pixelnn_forward.1} parent=11 // pred_region
          _
        $region44: #{pixelnn_forward.1} parent=11 // pred_fallthru
          _
        // Predicated region
        $region45: #{pixelnn_forward.1} parent=11 // pred_check
          %p323 = pneg %p248
        $region46: #{pixelnn_forward.1} parent=11 // pred_check_branch
          %325 = sbr.rel (%p323) target = $region48
        $region47: #{pixelnn_forward.1} parent=11 // pred_region
          _
        $region48: #{pixelnn_forward.1} parent=11 // pred_fallthru
          _
      $region12: #{pixelnn_forward.1} parent=5 // pred_fallthru
        _
      %p326 = scmp.lt.s32.totalorder %s19, 2
      // Predicated region
      $region49: #{pixelnn_forward.1} parent=5 // pred_check
        %p327 = pneg %p326
      $region50: #{pixelnn_forward.1} parent=5 // pred_check_branch
        %329 = sbr.rel (%p327) target = $region52
      $region51: #{pixelnn_forward.1} parent=5 // pred_region
        // Predicated region
        $region53: #{pixelnn_forward.1} parent=51 // pred_check
          %p330 = pneg %p74
        $region54: #{pixelnn_forward.1} parent=51 // pred_check_branch
          %332 = sbr.rel (%p330) target = $region56
        $region55: #{pixelnn_forward.1} parent=51 // pred_region
          %s333 = smul.u32 2, %s27
          %p334 = scmp.lt.s32.totalorder %s26, 1
          %s335 = scalar_select %p334, %s26, 1
          %p336 = scmp.lt.s32.totalorder %s333, 1
          %s337 = scalar_select %p336, %s333, 1
          %s338 = smul.addr %s335, 2
          %s339 = sadd.s32 %s337, %s338
          %s340 = smul.addr %s339, 4
          %s341 = scalar_lea.vmem %s1, %s340
          %s342 = smul.u32 2, %s27
        $region56: #{pixelnn_forward.1} parent=51 // pred_fallthru
          _
      $region52: #{pixelnn_forward.1} parent=5 // pred_fallthru
        _
      %p343 = scmp.le.s32.totalorder 1, %s19
      %p344 = scmp.lt.s32.totalorder %s19, 3
      %p345 = pnand %p343, %p344
      %p346 = pneg %p345
      // Predicated region
      $region57: #{pixelnn_forward.1} parent=5 // pred_check
        _
      $region58: #{pixelnn_forward.1} parent=5 // pred_check_branch
        %348 = sbr.rel (%p345) target = $region60
      $region59: #{pixelnn_forward.1} parent=5 // pred_region
        %s349 = ssub.s32 %s19, 1
        // Predicated region
        $region61: #{pixelnn_forward.1} parent=59 // pred_check
          %p350 = pneg %p52
        $region62: #{pixelnn_forward.1} parent=59 // pred_check_branch
          %352 = sbr.rel (%p350) target = $region64
        $region63: #{pixelnn_forward.1} parent=59 // pred_region
          %353 = dma.done [#allocation4], 16
        $region64: #{pixelnn_forward.1} parent=59 // pred_fallthru
          _
        %354 = sfence
        %p355 = pneg %p52
        %p356 = pneg %p49
        %s357 = smul.u32 2, %s29
        %p358 = scmp.lt.s32.totalorder %s28, 1
        %s359 = scalar_select %p358, %s28, 1
        %p360 = scmp.lt.s32.totalorder %s357, 1
        %s361 = scalar_select %p360, %s357, 1
        %s362 = smul.addr %s359, 2
        %s363 = sadd.s32 %s361, %s362
        %s364 = smul.addr %s363, 4
        %s365 = scalar_lea.vmem %s1, %s364
        %p366 = pneg %p80
        %p367 = pneg %p77
        %p368 = pneg %p101
        %p369 = pneg %p98
        %p370 = pneg %p122
        %p371 = pneg %p119
        %p372 = pneg %p143
        %p373 = pneg %p140
        %p374 = pneg %p164
        %p375 = pneg %p161
        %p376 = pneg %p185
        %p377 = pneg %p182
        %p378 = pneg %p206
        %p379 = pneg %p203
        %p380 = pneg %p227
        %p381 = pneg %p224
        %p382 = pneg %p248
        %p383 = pneg %p245
        %p384 = pneg %p276
        %p385 = pneg %p273
        %s386 = smul.u32 2, %s29
        %p387 = scmp.lt.s32.totalorder %s28, 1
        %s388 = scalar_select %p387, %s28, 1
        %p389 = scmp.lt.s32.totalorder %s386, 1
        %s390 = scalar_select %p389, %s386, 1
        %s391 = smul.addr %s388, 2
        %s392 = sadd.s32 %s390, %s391
        %s393 = scalar_lea.vmem %s10, %s392
        %s394 = smul.u32 2, %s29
        %p395 = scmp.lt.s32.totalorder %s28, 1
        %s396 = scalar_select %p395, %s28, 1
        %p397 = scmp.lt.s32.totalorder %s394, 1
        %s398 = scalar_select %p397, %s394, 1
        %s399 = smul.addr %s396, 2
        %s400 = sadd.s32 %s398, %s399
        %s401 = smul.addr %s400, 4
        %s402 = scalar_lea.vmem %s1, %s401
        %s403 = smul.u32 2, %s29
        %s404 = smul.u32 2, %s29
        %p405 = scmp.lt.s32.totalorder %s28, 1
        %s406 = scalar_select %p405, %s28, 1
        %p407 = scmp.lt.s32.totalorder %s404, 1
        %s408 = scalar_select %p407, %s404, 1
        %s409 = smul.addr %s406, 2
        %s410 = sadd.s32 %s408, %s409
        %s411 = scalar_lea.vmem %s10, %s410
        %s412 = smul.u32 2, %s29
        %v414 = vld [vmem:[%s402] sm:$0xff]
        %v415 = vld [vmem:[%s2] sm:$0xff]
        %v416 = vld [vmem:[%s2 + $0x8] sm:$0xff]
        %v417 = vld [vmem:[%s2 + $0x10] sm:$0xff]
        %v418 = vld [vmem:[%s2 + $0x18] sm:$0xff]
        %v419 = vld [vmem:[%s2 + $0x20] sm:$0xff]
        %v420 = vld [vmem:[%s2 + $0x28] sm:$0xff]
        %v421 = vld [vmem:[%s2 + $0x30] sm:$0xff]
        %v422 = vld [vmem:[%s2 + $0x38] sm:$0xff]
        %v423 = vld [vmem:[%s2 + $0x40] sm:$0xff]
        %v424 = vld [vmem:[%s2 + $0x48] sm:$0xff]
        %v425 = vld [vmem:[%s2 + $0x50] sm:$0xff]
        %v426 = vld [vmem:[%s2 + $0x58] sm:$0xff]
        %v427 = vld [vmem:[%s2 + $0x60] sm:$0xff]
        %v428 = vld [vmem:[%s2 + $0x68] sm:$0xff]
        %v429 = vld [vmem:[%s2 + $0x70] sm:$0xff]
        %v430 = vld [vmem:[%s2 + $0x78] sm:$0xff]
        %432 = vset.pattern.permute.xlu0 0
        %433 = vperm.xlu0 %432, %v415
        %v434 = vpop.permute.xlu0 %433
        %437 = vset.pattern.permute.xlu0 0
        %438 = vperm.xlu0 %437, %v416
        %v439 = vpop.permute.xlu0 %438
        %442 = vset.pattern.permute.xlu0 0
        %443 = vperm.xlu0 %442, %v417
        %v444 = vpop.permute.xlu0 %443
        %447 = vset.pattern.permute.xlu0 0
        %448 = vperm.xlu0 %447, %v418
        %v449 = vpop.permute.xlu0 %448
        %452 = vset.pattern.permute.xlu0 0
        %453 = vperm.xlu0 %452, %v419
        %v454 = vpop.permute.xlu0 %453
        %457 = vset.pattern.permute.xlu0 0
        %458 = vperm.xlu0 %457, %v420
        %v459 = vpop.permute.xlu0 %458
        %462 = vset.pattern.permute.xlu0 0
        %463 = vperm.xlu0 %462, %v421
        %v464 = vpop.permute.xlu0 %463
        %467 = vset.pattern.permute.xlu0 0
        %468 = vperm.xlu0 %467, %v422
        %v469 = vpop.permute.xlu0 %468
        %472 = vset.pattern.permute.xlu0 0
        %473 = vperm.xlu0 %472, %v423
        %v474 = vpop.permute.xlu0 %473
        %477 = vset.pattern.permute.xlu0 0
        %478 = vperm.xlu0 %477, %v424
        %v479 = vpop.permute.xlu0 %478
        %482 = vset.pattern.permute.xlu0 0
        %483 = vperm.xlu0 %482, %v425
        %v484 = vpop.permute.xlu0 %483
        %487 = vset.pattern.permute.xlu0 0
        %488 = vperm.xlu0 %487, %v426
        %v489 = vpop.permute.xlu0 %488
        %492 = vset.pattern.permute.xlu0 0
        %493 = vperm.xlu0 %492, %v427
        %v494 = vpop.permute.xlu0 %493
        %497 = vset.pattern.permute.xlu0 0
        %498 = vperm.xlu0 %497, %v428
        %v499 = vpop.permute.xlu0 %498
        %502 = vset.pattern.permute.xlu0 0
        %503 = vperm.xlu0 %502, %v429
        %v504 = vpop.permute.xlu0 %503
        %507 = vset.pattern.permute.xlu0 0
        %508 = vperm.xlu0 %507, %v430
        %v509 = vpop.permute.xlu0 %508
        %v512 = vlaneseq
        %v513 = vshrl.u32 %v512, 7
        %v514 = vsub.s32 0, %v513
        %v515 = vrot.slane %v414, %v514
        %v516 = vlaneseq
        %v517 = vshrl.u32 %v516, 7
        %v518 = vsub.s32 4, %v517
        %v519 = vrot.slane %v414, %v518
        %v522 = vlaneseq
        %v523 = vshrl.u32 %v522, 7
        %v524 = vsub.s32 0, %v523
        %v525 = vrot.slane %v515, %v524
        %v526 = vlaneseq
        %v527 = vshrl.u32 %v526, 7
        %v528 = vsub.s32 0, %v527
        %v529 = vrot.slane %v519, %v528
        %v530 = vmul.f32 %v434, %v525
        %v531 = vmul.f32 %v434, %v529
        %v532 = vmul.f32 %v439, %v525
        %v533 = vmul.f32 %v439, %v529
        %v534 = vmul.f32 %v444, %v525
        %v535 = vmul.f32 %v444, %v529
        %v536 = vmul.f32 %v449, %v525
        %v537 = vmul.f32 %v449, %v529
        %v538 = vmul.f32 %v454, %v525
        %v539 = vmul.f32 %v454, %v529
        %v540 = vmul.f32 %v459, %v525
        %v541 = vmul.f32 %v459, %v529
        %v542 = vmul.f32 %v464, %v525
        %v543 = vmul.f32 %v464, %v529
        %v544 = vmul.f32 %v469, %v525
        %v545 = vmul.f32 %v469, %v529
        %v546 = vmul.f32 %v474, %v525
        %v547 = vmul.f32 %v474, %v529
        %v548 = vmul.f32 %v479, %v525
        %v549 = vmul.f32 %v479, %v529
        %v550 = vmul.f32 %v484, %v525
        %v551 = vmul.f32 %v484, %v529
        %v552 = vmul.f32 %v489, %v525
        %v553 = vmul.f32 %v489, %v529
        %v554 = vmul.f32 %v494, %v525
        %v555 = vmul.f32 %v494, %v529
        %v556 = vmul.f32 %v499, %v525
        %v557 = vmul.f32 %v499, %v529
        %v558 = vmul.f32 %v504, %v525
        %v559 = vmul.f32 %v504, %v529
        %v560 = vmul.f32 %v509, %v525
        %v561 = vmul.f32 %v509, %v529
        %v562 = vld [vmem:[%s3] sm:$0xff]
        %v563 = vld [vmem:[%s3 + $0x8] sm:$0xff]
        %v564 = vld [vmem:[%s3 + $0x10] sm:$0xff]
        %v565 = vld [vmem:[%s3 + $0x18] sm:$0xff]
        %v566 = vld [vmem:[%s3 + $0x20] sm:$0xff]
        %v567 = vld [vmem:[%s3 + $0x28] sm:$0xff]
        %v568 = vld [vmem:[%s3 + $0x30] sm:$0xff]
        %v569 = vld [vmem:[%s3 + $0x38] sm:$0xff]
        %v570 = vld [vmem:[%s3 + $0x40] sm:$0xff]
        %v571 = vld [vmem:[%s3 + $0x48] sm:$0xff]
        %v572 = vld [vmem:[%s3 + $0x50] sm:$0xff]
        %v573 = vld [vmem:[%s3 + $0x58] sm:$0xff]
        %v574 = vld [vmem:[%s3 + $0x60] sm:$0xff]
        %v575 = vld [vmem:[%s3 + $0x68] sm:$0xff]
        %v576 = vld [vmem:[%s3 + $0x70] sm:$0xff]
        %v577 = vld [vmem:[%s3 + $0x78] sm:$0xff]
        %579 = vset.pattern.permute.xlu0 0
        %580 = vperm.xlu0 %579, %v562
        %v581 = vpop.permute.xlu0 %580
        %584 = vset.pattern.permute.xlu0 0
        %585 = vperm.xlu0 %584, %v563
        %v586 = vpop.permute.xlu0 %585
        %589 = vset.pattern.permute.xlu0 0
        %590 = vperm.xlu0 %589, %v564
        %v591 = vpop.permute.xlu0 %590
        %594 = vset.pattern.permute.xlu0 0
        %595 = vperm.xlu0 %594, %v565
        %v596 = vpop.permute.xlu0 %595
        %599 = vset.pattern.permute.xlu0 0
        %600 = vperm.xlu0 %599, %v566
        %v601 = vpop.permute.xlu0 %600
        %604 = vset.pattern.permute.xlu0 0
        %605 = vperm.xlu0 %604, %v567
        %v606 = vpop.permute.xlu0 %605
        %609 = vset.pattern.permute.xlu0 0
        %610 = vperm.xlu0 %609, %v568
        %v611 = vpop.permute.xlu0 %610
        %614 = vset.pattern.permute.xlu0 0
        %615 = vperm.xlu0 %614, %v569
        %v616 = vpop.permute.xlu0 %615
        %619 = vset.pattern.permute.xlu0 0
        %620 = vperm.xlu0 %619, %v570
        %v621 = vpop.permute.xlu0 %620
        %624 = vset.pattern.permute.xlu0 0
        %625 = vperm.xlu0 %624, %v571
        %v626 = vpop.permute.xlu0 %625
        %629 = vset.pattern.permute.xlu0 0
        %630 = vperm.xlu0 %629, %v572
        %v631 = vpop.permute.xlu0 %630
        %634 = vset.pattern.permute.xlu0 0
        %635 = vperm.xlu0 %634, %v573
        %v636 = vpop.permute.xlu0 %635
        %639 = vset.pattern.permute.xlu0 0
        %640 = vperm.xlu0 %639, %v574
        %v641 = vpop.permute.xlu0 %640
        %644 = vset.pattern.permute.xlu0 0
        %645 = vperm.xlu0 %644, %v575
        %v646 = vpop.permute.xlu0 %645
        %649 = vset.pattern.permute.xlu0 0
        %650 = vperm.xlu0 %649, %v576
        %v651 = vpop.permute.xlu0 %650
        %654 = vset.pattern.permute.xlu0 0
        %655 = vperm.xlu0 %654, %v577
        %v656 = vpop.permute.xlu0 %655
        %v658 = vadd.f32 %v530, %v581
        %v659 = vadd.f32 %v531, %v581
        %v660 = vadd.f32 %v532, %v586
        %v661 = vadd.f32 %v533, %v586
        %v662 = vadd.f32 %v534, %v591
        %v663 = vadd.f32 %v535, %v591
        %v664 = vadd.f32 %v536, %v596
        %v665 = vadd.f32 %v537, %v596
        %v666 = vadd.f32 %v538, %v601
        %v667 = vadd.f32 %v539, %v601
        %v668 = vadd.f32 %v540, %v606
        %v669 = vadd.f32 %v541, %v606
        %v670 = vadd.f32 %v542, %v611
        %v671 = vadd.f32 %v543, %v611
        %v672 = vadd.f32 %v544, %v616
        %v673 = vadd.f32 %v545, %v616
        %v674 = vadd.f32 %v546, %v621
        %v675 = vadd.f32 %v547, %v621
        %v676 = vadd.f32 %v548, %v626
        %v677 = vadd.f32 %v549, %v626
        %v678 = vadd.f32 %v550, %v631
        %v679 = vadd.f32 %v551, %v631
        %v680 = vadd.f32 %v552, %v636
        %v681 = vadd.f32 %v553, %v636
        %v682 = vadd.f32 %v554, %v641
        %v683 = vadd.f32 %v555, %v641
        %v684 = vadd.f32 %v556, %v646
        %v685 = vadd.f32 %v557, %v646
        %v686 = vadd.f32 %v558, %v651
        %v687 = vadd.f32 %v559, %v651
        %v688 = vadd.f32 %v560, %v656
        %v689 = vadd.f32 %v561, %v656
        %690 = vset.pattern.permute.xlu0 1
        %691 = vperm.xlu0 %690, %v415
        %v692 = vpop.permute.xlu0 %691
        %694 = vset.pattern.permute.xlu0 1
        %695 = vperm.xlu0 %694, %v416
        %v696 = vpop.permute.xlu0 %695
        %698 = vset.pattern.permute.xlu0 1
        %699 = vperm.xlu0 %698, %v417
        %v700 = vpop.permute.xlu0 %699
        %702 = vset.pattern.permute.xlu0 1
        %703 = vperm.xlu0 %702, %v418
        %v704 = vpop.permute.xlu0 %703
        %706 = vset.pattern.permute.xlu0 1
        %707 = vperm.xlu0 %706, %v419
        %v708 = vpop.permute.xlu0 %707
        %710 = vset.pattern.permute.xlu0 1
        %711 = vperm.xlu0 %710, %v420
        %v712 = vpop.permute.xlu0 %711
        %714 = vset.pattern.permute.xlu0 1
        %715 = vperm.xlu0 %714, %v421
        %v716 = vpop.permute.xlu0 %715
        %718 = vset.pattern.permute.xlu0 1
        %719 = vperm.xlu0 %718, %v422
        %v720 = vpop.permute.xlu0 %719
        %722 = vset.pattern.permute.xlu0 1
        %723 = vperm.xlu0 %722, %v423
        %v724 = vpop.permute.xlu0 %723
        %726 = vset.pattern.permute.xlu0 1
        %727 = vperm.xlu0 %726, %v424
        %v728 = vpop.permute.xlu0 %727
        %730 = vset.pattern.permute.xlu0 1
        %731 = vperm.xlu0 %730, %v425
        %v732 = vpop.permute.xlu0 %731
        %734 = vset.pattern.permute.xlu0 1
        %735 = vperm.xlu0 %734, %v426
        %v736 = vpop.permute.xlu0 %735
        %738 = vset.pattern.permute.xlu0 1
        %739 = vperm.xlu0 %738, %v427
        %v740 = vpop.permute.xlu0 %739
        %742 = vset.pattern.permute.xlu0 1
        %743 = vperm.xlu0 %742, %v428
        %v744 = vpop.permute.xlu0 %743
        %746 = vset.pattern.permute.xlu0 1
        %747 = vperm.xlu0 %746, %v429
        %v748 = vpop.permute.xlu0 %747
        %750 = vset.pattern.permute.xlu0 1
        %751 = vperm.xlu0 %750, %v430
        %v752 = vpop.permute.xlu0 %751
        %v754 = vlaneseq
        %v755 = vshrl.u32 %v754, 7
        %v756 = vsub.s32 1, %v755
        %v757 = vrot.slane %v414, %v756
        %v758 = vlaneseq
        %v759 = vshrl.u32 %v758, 7
        %v760 = vsub.s32 5, %v759
        %v761 = vrot.slane %v414, %v760
        %v764 = vlaneseq
        %v765 = vshrl.u32 %v764, 7
        %v766 = vsub.s32 1, %v765
        %v767 = vrot.slane %v757, %v766
        %v768 = vlaneseq
        %v769 = vshrl.u32 %v768, 7
        %v770 = vsub.s32 1, %v769
        %v771 = vrot.slane %v761, %v770
        %v772 = vmul.f32 %v692, %v767
        %v773 = vmul.f32 %v692, %v771
        %v774 = vmul.f32 %v696, %v767
        %v775 = vmul.f32 %v696, %v771
        %v776 = vmul.f32 %v700, %v767
        %v777 = vmul.f32 %v700, %v771
        %v778 = vmul.f32 %v704, %v767
        %v779 = vmul.f32 %v704, %v771
        %v780 = vmul.f32 %v708, %v767
        %v781 = vmul.f32 %v708, %v771
        %v782 = vmul.f32 %v712, %v767
        %v783 = vmul.f32 %v712, %v771
        %v784 = vmul.f32 %v716, %v767
        %v785 = vmul.f32 %v716, %v771
        %v786 = vmul.f32 %v720, %v767
        %v787 = vmul.f32 %v720, %v771
        %v788 = vmul.f32 %v724, %v767
        %v789 = vmul.f32 %v724, %v771
        %v790 = vmul.f32 %v728, %v767
        %v791 = vmul.f32 %v728, %v771
        %v792 = vmul.f32 %v732, %v767
        %v793 = vmul.f32 %v732, %v771
        %v794 = vmul.f32 %v736, %v767
        %v795 = vmul.f32 %v736, %v771
        %v796 = vmul.f32 %v740, %v767
        %v797 = vmul.f32 %v740, %v771
        %v798 = vmul.f32 %v744, %v767
        %v799 = vmul.f32 %v744, %v771
        %v800 = vmul.f32 %v748, %v767
        %v801 = vmul.f32 %v748, %v771
        %v802 = vmul.f32 %v752, %v767
        %v803 = vmul.f32 %v752, %v771
        %v804 = vadd.f32 %v658, %v772
        %v805 = vadd.f32 %v659, %v773
        %v806 = vadd.f32 %v660, %v774
        %v807 = vadd.f32 %v661, %v775
        %v808 = vadd.f32 %v662, %v776
        %v809 = vadd.f32 %v663, %v777
        %v810 = vadd.f32 %v664, %v778
        %v811 = vadd.f32 %v665, %v779
        %v812 = vadd.f32 %v666, %v780
        %v813 = vadd.f32 %v667, %v781
        %v814 = vadd.f32 %v668, %v782
        %v815 = vadd.f32 %v669, %v783
        %v816 = vadd.f32 %v670, %v784
        %v817 = vadd.f32 %v671, %v785
        %v818 = vadd.f32 %v672, %v786
        %v819 = vadd.f32 %v673, %v787
        %v820 = vadd.f32 %v674, %v788
        %v821 = vadd.f32 %v675, %v789
        %v822 = vadd.f32 %v676, %v790
        %v823 = vadd.f32 %v677, %v791
        %v824 = vadd.f32 %v678, %v792
        %v825 = vadd.f32 %v679, %v793
        %v826 = vadd.f32 %v680, %v794
        %v827 = vadd.f32 %v681, %v795
        %v828 = vadd.f32 %v682, %v796
        %v829 = vadd.f32 %v683, %v797
        %v830 = vadd.f32 %v684, %v798
        %v831 = vadd.f32 %v685, %v799
        %v832 = vadd.f32 %v686, %v800
        %v833 = vadd.f32 %v687, %v801
        %v834 = vadd.f32 %v688, %v802
        %v835 = vadd.f32 %v689, %v803
        %836 = vset.pattern.permute.xlu0 2
        %837 = vperm.xlu0 %836, %v415
        %v838 = vpop.permute.xlu0 %837
        %840 = vset.pattern.permute.xlu0 2
        %841 = vperm.xlu0 %840, %v416
        %v842 = vpop.permute.xlu0 %841
        %844 = vset.pattern.permute.xlu0 2
        %845 = vperm.xlu0 %844, %v417
        %v846 = vpop.permute.xlu0 %845
        %848 = vset.pattern.permute.xlu0 2
        %849 = vperm.xlu0 %848, %v418
        %v850 = vpop.permute.xlu0 %849
        %852 = vset.pattern.permute.xlu0 2
        %853 = vperm.xlu0 %852, %v419
        %v854 = vpop.permute.xlu0 %853
        %856 = vset.pattern.permute.xlu0 2
        %857 = vperm.xlu0 %856, %v420
        %v858 = vpop.permute.xlu0 %857
        %860 = vset.pattern.permute.xlu0 2
        %861 = vperm.xlu0 %860, %v421
        %v862 = vpop.permute.xlu0 %861
        %864 = vset.pattern.permute.xlu0 2
        %865 = vperm.xlu0 %864, %v422
        %v866 = vpop.permute.xlu0 %865
        %868 = vset.pattern.permute.xlu0 2
        %869 = vperm.xlu0 %868, %v423
        %v870 = vpop.permute.xlu0 %869
        %872 = vset.pattern.permute.xlu0 2
        %873 = vperm.xlu0 %872, %v424
        %v874 = vpop.permute.xlu0 %873
        %876 = vset.pattern.permute.xlu0 2
        %877 = vperm.xlu0 %876, %v425
        %v878 = vpop.permute.xlu0 %877
        %880 = vset.pattern.permute.xlu0 2
        %881 = vperm.xlu0 %880, %v426
        %v882 = vpop.permute.xlu0 %881
        %884 = vset.pattern.permute.xlu0 2
        %885 = vperm.xlu0 %884, %v427
        %v886 = vpop.permute.xlu0 %885
        %888 = vset.pattern.permute.xlu0 2
        %889 = vperm.xlu0 %888, %v428
        %v890 = vpop.permute.xlu0 %889
        %892 = vset.pattern.permute.xlu0 2
        %893 = vperm.xlu0 %892, %v429
        %v894 = vpop.permute.xlu0 %893
        %896 = vset.pattern.permute.xlu0 2
        %897 = vperm.xlu0 %896, %v430
        %v898 = vpop.permute.xlu0 %897
        %v900 = vlaneseq
        %v901 = vshrl.u32 %v900, 7
        %v902 = vsub.s32 2, %v901
        %v903 = vrot.slane %v414, %v902
        %v904 = vlaneseq
        %v905 = vshrl.u32 %v904, 7
        %v906 = vsub.s32 6, %v905
        %v907 = vrot.slane %v414, %v906
        %v910 = vlaneseq
        %v911 = vshrl.u32 %v910, 7
        %v912 = vsub.s32 2, %v911
        %v913 = vrot.slane %v903, %v912
        %v914 = vlaneseq
        %v915 = vshrl.u32 %v914, 7
        %v916 = vsub.s32 2, %v915
        %v917 = vrot.slane %v907, %v916
        %v918 = vmul.f32 %v838, %v913
        %v919 = vmul.f32 %v838, %v917
        %v920 = vmul.f32 %v842, %v913
        %v921 = vmul.f32 %v842, %v917
        %v922 = vmul.f32 %v846, %v913
        %v923 = vmul.f32 %v846, %v917
        %v924 = vmul.f32 %v850, %v913
        %v925 = vmul.f32 %v850, %v917
        %v926 = vmul.f32 %v854, %v913
        %v927 = vmul.f32 %v854, %v917
        %v928 = vmul.f32 %v858, %v913
        %v929 = vmul.f32 %v858, %v917
        %v930 = vmul.f32 %v862, %v913
        %v931 = vmul.f32 %v862, %v917
        %v932 = vmul.f32 %v866, %v913
        %v933 = vmul.f32 %v866, %v917
        %v934 = vmul.f32 %v870, %v913
        %v935 = vmul.f32 %v870, %v917
        %v936 = vmul.f32 %v874, %v913
        %v937 = vmul.f32 %v874, %v917
        %v938 = vmul.f32 %v878, %v913
        %v939 = vmul.f32 %v878, %v917
        %v940 = vmul.f32 %v882, %v913
        %v941 = vmul.f32 %v882, %v917
        %v942 = vmul.f32 %v886, %v913
        %v943 = vmul.f32 %v886, %v917
        %v944 = vmul.f32 %v890, %v913
        %v945 = vmul.f32 %v890, %v917
        %v946 = vmul.f32 %v894, %v913
        %v947 = vmul.f32 %v894, %v917
        %v948 = vmul.f32 %v898, %v913
        %v949 = vmul.f32 %v898, %v917
        %v950 = vadd.f32 %v804, %v918
        %v951 = vadd.f32 %v805, %v919
        %v952 = vadd.f32 %v806, %v920
        %v953 = vadd.f32 %v807, %v921
        %v954 = vadd.f32 %v808, %v922
        %v955 = vadd.f32 %v809, %v923
        %v956 = vadd.f32 %v810, %v924
        %v957 = vadd.f32 %v811, %v925
        %v958 = vadd.f32 %v812, %v926
        %v959 = vadd.f32 %v813, %v927
        %v960 = vadd.f32 %v814, %v928
        %v961 = vadd.f32 %v815, %v929
        %v962 = vadd.f32 %v816, %v930
        %v963 = vadd.f32 %v817, %v931
        %v964 = vadd.f32 %v818, %v932
        %v965 = vadd.f32 %v819, %v933
        %v966 = vadd.f32 %v820, %v934
        %v967 = vadd.f32 %v821, %v935
        %v968 = vadd.f32 %v822, %v936
        %v969 = vadd.f32 %v823, %v937
        %v970 = vadd.f32 %v824, %v938
        %v971 = vadd.f32 %v825, %v939
        %v972 = vadd.f32 %v826, %v940
        %v973 = vadd.f32 %v827, %v941
        %v974 = vadd.f32 %v828, %v942
        %v975 = vadd.f32 %v829, %v943
        %v976 = vadd.f32 %v830, %v944
        %v977 = vadd.f32 %v831, %v945
        %v978 = vadd.f32 %v832, %v946
        %v979 = vadd.f32 %v833, %v947
        %v980 = vadd.f32 %v834, %v948
        %v981 = vadd.f32 %v835, %v949
        %982 = vset.pattern.permute.xlu0 3
        %983 = vperm.xlu0 %982, %v415
        %v984 = vpop.permute.xlu0 %983
        %986 = vset.pattern.permute.xlu0 3
        %987 = vperm.xlu0 %986, %v416
        %v988 = vpop.permute.xlu0 %987
        %990 = vset.pattern.permute.xlu0 3
        %991 = vperm.xlu0 %990, %v417
        %v992 = vpop.permute.xlu0 %991
        %994 = vset.pattern.permute.xlu0 3
        %995 = vperm.xlu0 %994, %v418
        %v996 = vpop.permute.xlu0 %995
        %998 = vset.pattern.permute.xlu0 3
        %999 = vperm.xlu0 %998, %v419
        %v1000 = vpop.permute.xlu0 %999
        %1002 = vset.pattern.permute.xlu0 3
        %1003 = vperm.xlu0 %1002, %v420
        %v1004 = vpop.permute.xlu0 %1003
        %1006 = vset.pattern.permute.xlu0 3
        %1007 = vperm.xlu0 %1006, %v421
        %v1008 = vpop.permute.xlu0 %1007
        %1010 = vset.pattern.permute.xlu0 3
        %1011 = vperm.xlu0 %1010, %v422
        %v1012 = vpop.permute.xlu0 %1011
        %1014 = vset.pattern.permute.xlu0 3
        %1015 = vperm.xlu0 %1014, %v423
        %v1016 = vpop.permute.xlu0 %1015
        %1018 = vset.pattern.permute.xlu0 3
        %1019 = vperm.xlu0 %1018, %v424
        %v1020 = vpop.permute.xlu0 %1019
        %1022 = vset.pattern.permute.xlu0 3
        %1023 = vperm.xlu0 %1022, %v425
        %v1024 = vpop.permute.xlu0 %1023
        %1026 = vset.pattern.permute.xlu0 3
        %1027 = vperm.xlu0 %1026, %v426
        %v1028 = vpop.permute.xlu0 %1027
        %1030 = vset.pattern.permute.xlu0 3
        %1031 = vperm.xlu0 %1030, %v427
        %v1032 = vpop.permute.xlu0 %1031
        %1034 = vset.pattern.permute.xlu0 3
        %1035 = vperm.xlu0 %1034, %v428
        %v1036 = vpop.permute.xlu0 %1035
        %1038 = vset.pattern.permute.xlu0 3
        %1039 = vperm.xlu0 %1038, %v429
        %v1040 = vpop.permute.xlu0 %1039
        %1042 = vset.pattern.permute.xlu0 3
        %1043 = vperm.xlu0 %1042, %v430
        %v1044 = vpop.permute.xlu0 %1043
        %v1046 = vlaneseq
        %v1047 = vshrl.u32 %v1046, 7
        %v1048 = vsub.s32 3, %v1047
        %v1049 = vrot.slane %v414, %v1048
        %v1050 = vlaneseq
        %v1051 = vshrl.u32 %v1050, 7
        %v1052 = vsub.s32 7, %v1051
        %v1053 = vrot.slane %v414, %v1052
        %v1056 = vlaneseq
        %v1057 = vshrl.u32 %v1056, 7
        %v1058 = vsub.s32 3, %v1057
        %v1059 = vrot.slane %v1049, %v1058
        %v1060 = vlaneseq
        %v1061 = vshrl.u32 %v1060, 7
        %v1062 = vsub.s32 3, %v1061
        %v1063 = vrot.slane %v1053, %v1062
        %v1064 = vmul.f32 %v984, %v1059
        %v1065 = vmul.f32 %v984, %v1063
        %v1066 = vmul.f32 %v988, %v1059
        %v1067 = vmul.f32 %v988, %v1063
        %v1068 = vmul.f32 %v992, %v1059
        %v1069 = vmul.f32 %v992, %v1063
        %v1070 = vmul.f32 %v996, %v1059
        %v1071 = vmul.f32 %v996, %v1063
        %v1072 = vmul.f32 %v1000, %v1059
        %v1073 = vmul.f32 %v1000, %v1063
        %v1074 = vmul.f32 %v1004, %v1059
        %v1075 = vmul.f32 %v1004, %v1063
        %v1076 = vmul.f32 %v1008, %v1059
        %v1077 = vmul.f32 %v1008, %v1063
        %v1078 = vmul.f32 %v1012, %v1059
        %v1079 = vmul.f32 %v1012, %v1063
        %v1080 = vmul.f32 %v1016, %v1059
        %v1081 = vmul.f32 %v1016, %v1063
        %v1082 = vmul.f32 %v1020, %v1059
        %v1083 = vmul.f32 %v1020, %v1063
        %v1084 = vmul.f32 %v1024, %v1059
        %v1085 = vmul.f32 %v1024, %v1063
        %v1086 = vmul.f32 %v1028, %v1059
        %v1087 = vmul.f32 %v1028, %v1063
        %v1088 = vmul.f32 %v1032, %v1059
        %v1089 = vmul.f32 %v1032, %v1063
        %v1090 = vmul.f32 %v1036, %v1059
        %v1091 = vmul.f32 %v1036, %v1063
        %v1092 = vmul.f32 %v1040, %v1059
        %v1093 = vmul.f32 %v1040, %v1063
        %v1094 = vmul.f32 %v1044, %v1059
        %v1095 = vmul.f32 %v1044, %v1063
        %v1096 = vadd.f32 %v950, %v1064
        %v1097 = vadd.f32 %v951, %v1065
        %v1098 = vadd.f32 %v952, %v1066
        %v1099 = vadd.f32 %v953, %v1067
        %v1100 = vadd.f32 %v954, %v1068
        %v1101 = vadd.f32 %v955, %v1069
        %v1102 = vadd.f32 %v956, %v1070
        %v1103 = vadd.f32 %v957, %v1071
        %v1104 = vadd.f32 %v958, %v1072
        %v1105 = vadd.f32 %v959, %v1073
        %v1106 = vadd.f32 %v960, %v1074
        %v1107 = vadd.f32 %v961, %v1075
        %v1108 = vadd.f32 %v962, %v1076
        %v1109 = vadd.f32 %v963, %v1077
        %v1110 = vadd.f32 %v964, %v1078
        %v1111 = vadd.f32 %v965, %v1079
        %v1112 = vadd.f32 %v966, %v1080
        %v1113 = vadd.f32 %v967, %v1081
        %v1114 = vadd.f32 %v968, %v1082
        %v1115 = vadd.f32 %v969, %v1083
        %v1116 = vadd.f32 %v970, %v1084
        %v1117 = vadd.f32 %v971, %v1085
        %v1118 = vadd.f32 %v972, %v1086
        %v1119 = vadd.f32 %v973, %v1087
        %v1120 = vadd.f32 %v974, %v1088
        %v1121 = vadd.f32 %v975, %v1089
        %v1122 = vadd.f32 %v976, %v1090
        %v1123 = vadd.f32 %v977, %v1091
        %v1124 = vadd.f32 %v978, %v1092
        %v1125 = vadd.f32 %v979, %v1093
        %v1126 = vadd.f32 %v980, %v1094
        %v1127 = vadd.f32 %v981, %v1095
        %v1128 = vmax.f32 %v1096, 0.0
        %v1129 = vmax.f32 %v1097, 0.0
        %v1130 = vmax.f32 %v1098, 0.0
        %v1131 = vmax.f32 %v1099, 0.0
        %v1132 = vmax.f32 %v1100, 0.0
        %v1133 = vmax.f32 %v1101, 0.0
        %v1134 = vmax.f32 %v1102, 0.0
        %v1135 = vmax.f32 %v1103, 0.0
        %v1136 = vmax.f32 %v1104, 0.0
        %v1137 = vmax.f32 %v1105, 0.0
        %v1138 = vmax.f32 %v1106, 0.0
        %v1139 = vmax.f32 %v1107, 0.0
        %v1140 = vmax.f32 %v1108, 0.0
        %v1141 = vmax.f32 %v1109, 0.0
        %v1142 = vmax.f32 %v1110, 0.0
        %v1143 = vmax.f32 %v1111, 0.0
        %v1144 = vmax.f32 %v1112, 0.0
        %v1145 = vmax.f32 %v1113, 0.0
        %v1146 = vmax.f32 %v1114, 0.0
        %v1147 = vmax.f32 %v1115, 0.0
        %v1148 = vmax.f32 %v1116, 0.0
        %v1149 = vmax.f32 %v1117, 0.0
        %v1150 = vmax.f32 %v1118, 0.0
        %v1151 = vmax.f32 %v1119, 0.0
        %v1152 = vmax.f32 %v1120, 0.0
        %v1153 = vmax.f32 %v1121, 0.0
        %v1154 = vmax.f32 %v1122, 0.0
        %v1155 = vmax.f32 %v1123, 0.0
        %v1156 = vmax.f32 %v1124, 0.0
        %v1157 = vmax.f32 %v1125, 0.0
        %v1158 = vmax.f32 %v1126, 0.0
        %v1159 = vmax.f32 %v1127, 0.0
        %v1160 = vld [vmem:[%s4] sm:$0xf]
        %v1161 = vld [vmem:[%s4 + $0x4] sm:$0xf]
        %v1162 = vld [vmem:[%s4 + $0x8] sm:$0xf]
        %v1163 = vld [vmem:[%s4 + $0xc] sm:$0xf]
        %v1164 = vld [vmem:[%s4 + $0x10] sm:$0xf]
        %v1165 = vld [vmem:[%s4 + $0x14] sm:$0xf]
        %v1166 = vld [vmem:[%s4 + $0x18] sm:$0xf]
        %v1167 = vld [vmem:[%s4 + $0x1c] sm:$0xf]
        %v1168 = vld [vmem:[%s4 + $0x20] sm:$0xf]
        %v1169 = vld [vmem:[%s4 + $0x24] sm:$0xf]
        %v1170 = vld [vmem:[%s4 + $0x28] sm:$0xf]
        %v1171 = vld [vmem:[%s4 + $0x2c] sm:$0xf]
        %v1172 = vld [vmem:[%s4 + $0x30] sm:$0xf]
        %v1173 = vld [vmem:[%s4 + $0x34] sm:$0xf]
        %v1174 = vld [vmem:[%s4 + $0x38] sm:$0xf]
        %v1175 = vld [vmem:[%s4 + $0x3c] sm:$0xf]
        %v1176 = vpack.c.bf16 %v1130, %v1128
        %v1177 = vpack.c.bf16 %v1131, %v1129
        %v1178 = vpack.c.bf16 %v1134, %v1132
        %v1179 = vpack.c.bf16 %v1135, %v1133
        %v1180 = vpack.c.bf16 %v1138, %v1136
        %v1181 = vpack.c.bf16 %v1139, %v1137
        %v1182 = vpack.c.bf16 %v1142, %v1140
        %v1183 = vpack.c.bf16 %v1143, %v1141
        %v1184 = vpack.c.bf16 %v1146, %v1144
        %v1185 = vpack.c.bf16 %v1147, %v1145
        %v1186 = vpack.c.bf16 %v1150, %v1148
        %v1187 = vpack.c.bf16 %v1151, %v1149
        %v1188 = vpack.c.bf16 %v1154, %v1152
        %v1189 = vpack.c.bf16 %v1155, %v1153
        %v1190 = vpack.c.bf16 %v1158, %v1156
        %v1191 = vpack.c.bf16 %v1159, %v1157
        %v1192 = vld [vmem:[%s5] sm:$0xff]
        %v1193 = vld [vmem:[%s5 + $0x8] sm:$0xff]
        %v1194 = vld [vmem:[%s5 + $0x10] sm:$0xff]
        %v1195 = vld [vmem:[%s5 + $0x18] sm:$0xff]
        %v1196 = vld [vmem:[%s5 + $0x20] sm:$0xff]
        %v1197 = vld [vmem:[%s5 + $0x28] sm:$0xff]
        %v1198 = vld [vmem:[%s5 + $0x30] sm:$0xff]
        %v1199 = vld [vmem:[%s5 + $0x38] sm:$0xff]
        %v1200 = vld [vmem:[%s5 + $0x40] sm:$0xff]
        %v1201 = vld [vmem:[%s5 + $0x48] sm:$0xff]
        %v1202 = vld [vmem:[%s5 + $0x50] sm:$0xff]
        %v1203 = vld [vmem:[%s5 + $0x58] sm:$0xff]
        %v1204 = vld [vmem:[%s5 + $0x60] sm:$0xff]
        %v1205 = vld [vmem:[%s5 + $0x68] sm:$0xff]
        %v1206 = vld [vmem:[%s5 + $0x70] sm:$0xff]
        %v1207 = vld [vmem:[%s5 + $0x78] sm:$0xff]
        %1209 = vset.pattern.permute.xlu0 0
        %1210 = vperm.xlu0 %1209, %v1192
        %v1211 = vpop.permute.xlu0 %1210
        %1214 = vset.pattern.permute.xlu0 0
        %1215 = vperm.xlu0 %1214, %v1193
        %v1216 = vpop.permute.xlu0 %1215
        %1219 = vset.pattern.permute.xlu0 0
        %1220 = vperm.xlu0 %1219, %v1194
        %v1221 = vpop.permute.xlu0 %1220
        %1224 = vset.pattern.permute.xlu0 0
        %1225 = vperm.xlu0 %1224, %v1195
        %v1226 = vpop.permute.xlu0 %1225
        %1229 = vset.pattern.permute.xlu0 0
        %1230 = vperm.xlu0 %1229, %v1196
        %v1231 = vpop.permute.xlu0 %1230
        %1234 = vset.pattern.permute.xlu0 0
        %1235 = vperm.xlu0 %1234, %v1197
        %v1236 = vpop.permute.xlu0 %1235
        %1239 = vset.pattern.permute.xlu0 0
        %1240 = vperm.xlu0 %1239, %v1198
        %v1241 = vpop.permute.xlu0 %1240
        %1244 = vset.pattern.permute.xlu0 0
        %1245 = vperm.xlu0 %1244, %v1199
        %v1246 = vpop.permute.xlu0 %1245
        %1249 = vset.pattern.permute.xlu0 0
        %1250 = vperm.xlu0 %1249, %v1200
        %v1251 = vpop.permute.xlu0 %1250
        %1254 = vset.pattern.permute.xlu0 0
        %1255 = vperm.xlu0 %1254, %v1201
        %v1256 = vpop.permute.xlu0 %1255
        %1259 = vset.pattern.permute.xlu0 0
        %1260 = vperm.xlu0 %1259, %v1202
        %v1261 = vpop.permute.xlu0 %1260
        %1264 = vset.pattern.permute.xlu0 0
        %1265 = vperm.xlu0 %1264, %v1203
        %v1266 = vpop.permute.xlu0 %1265
        %1269 = vset.pattern.permute.xlu0 0
        %1270 = vperm.xlu0 %1269, %v1204
        %v1271 = vpop.permute.xlu0 %1270
        %1274 = vset.pattern.permute.xlu0 0
        %1275 = vperm.xlu0 %1274, %v1205
        %v1276 = vpop.permute.xlu0 %1275
        %1279 = vset.pattern.permute.xlu0 0
        %1280 = vperm.xlu0 %1279, %v1206
        %v1281 = vpop.permute.xlu0 %1280
        %1284 = vset.pattern.permute.xlu0 0
        %1285 = vperm.xlu0 %1284, %v1207
        %v1286 = vpop.permute.xlu0 %1285
        %v1304 = vunpack.c.l.b16 %v1160
        %v1305 = vunpack.c.l.b16 %v1161
        %v1306 = vunpack.c.l.b16 %v1162
        %v1307 = vunpack.c.l.b16 %v1163
        %v1308 = vunpack.c.l.b16 %v1164
        %v1309 = vunpack.c.l.b16 %v1165
        %v1310 = vunpack.c.l.b16 %v1166
        %v1311 = vunpack.c.l.b16 %v1167
        %v1312 = vunpack.c.l.b16 %v1168
        %v1313 = vunpack.c.l.b16 %v1169
        %v1314 = vunpack.c.l.b16 %v1170
        %v1315 = vunpack.c.l.b16 %v1171
        %v1316 = vunpack.c.l.b16 %v1172
        %v1317 = vunpack.c.l.b16 %v1173
        %v1318 = vunpack.c.l.b16 %v1174
        %v1319 = vunpack.c.l.b16 %v1175
        %v1320 = vpack.c.b16 %v1305, %v1304
        %v1321 = vpack.c.b16 %v1307, %v1306
        %v1322 = vpack.c.b16 %v1309, %v1308
        %v1323 = vpack.c.b16 %v1311, %v1310
        %v1324 = vpack.c.b16 %v1313, %v1312
        %v1325 = vpack.c.b16 %v1315, %v1314
        %v1326 = vpack.c.b16 %v1317, %v1316
        %v1327 = vpack.c.b16 %v1319, %v1318
        %1336 = vmatprep.subr.bf16.mxu0 %v1191
        %1337 = vmatpush1.bf16.msra.mxu0 %v1190
        %1338 = vmatprep.subr.bf16.mxu0 %v1189
        %1339 = vmatpush1.bf16.msra.mxu0 %v1188
        %1340 = vmatprep.subr.bf16.mxu0 %v1187
        %1341 = vmatpush1.bf16.msra.mxu0 %v1186
        %1342 = vmatprep.subr.bf16.mxu0 %v1185
        %1343 = vmatpush1.bf16.msra.mxu0 %v1184
        %1344 = vmatprep.subr.bf16.mxu0 %v1183
        %1345 = vmatpush1.bf16.msra.mxu0 %v1182
        %1346 = vmatprep.subr.bf16.mxu0 %v1181
        %1347 = vmatpush1.bf16.msra.mxu0 %v1180
        %1348 = vmatprep.subr.bf16.mxu0 %v1179
        %1349 = vmatpush1.bf16.msra.mxu0 %v1178
        %1350 = vmatprep.subr.bf16.mxu0 %v1177
        %1351 = vmatpush1.bf16.msra.mxu0 %v1176
        %1352 = vmatprep.subr.bf16.mxu0 0
        %1353 = vmatpush2.bf16.msra.mxu0 0
        %1354 = vmatprep.subr.bf16.mxu0 0
        %1355 = vmatpush2.bf16.msra.mxu0 0
        %1356 = vmatprep.subr.bf16.mxu0 0
        %1357 = vmatpush2.bf16.msra.mxu0 0
        %1358 = vmatprep.subr.bf16.mxu0 0
        %1359 = vmatpush2.bf16.msra.mxu0 0
        %1360 = vmatprep.subr.bf16.mxu0 0
        %1361 = vmatpush2.bf16.msra.mxu0 0
        %1362 = vmatprep.subr.bf16.mxu0 0
        %1363 = vmatpush2.bf16.msra.mxu0 0
        %1364 = vmatprep.subr.bf16.mxu0 0
        %1365 = vmatpush2.bf16.msra.mxu0 0
        %1366 = vmatprep.subr.bf16.mxu0 0
        %1367 = vmatpush2.bf16.msra.mxu0 0
        %1368 = vmatprep.mubr.bf16.mxu0 0
        %1369 = vmatmul.mubr.bf16.gmra.mxu0 %v1320
        %v1370 = vpop.f32.mrf.mxu0
        %v1371 = vadd.f32 %v1211, %v1370
        %v1372 = vpop.f32.mrf.mxu0
        %v1373 = vadd.f32 %v1211, %v1372
        %v1374 = vpop.f32.mrf.mxu0
        %v1375 = vadd.f32 %v1216, %v1374
        %v1376 = vpop.f32.mrf.mxu0
        %v1377 = vadd.f32 %v1216, %v1376
        %1378 = vmatprep.mubr.bf16.mxu0 0
        %1379 = vmatmul.mubr.bf16.gmra.mxu0 %v1321
        %v1380 = vpop.f32.mrf.mxu0
        %v1381 = vadd.f32 %v1221, %v1380
        %v1382 = vpop.f32.mrf.mxu0
        %v1383 = vadd.f32 %v1221, %v1382
        %v1384 = vpop.f32.mrf.mxu0
        %v1385 = vadd.f32 %v1226, %v1384
        %v1386 = vpop.f32.mrf.mxu0
        %v1387 = vadd.f32 %v1226, %v1386
        %1388 = vmatprep.mubr.bf16.mxu0 0
        %1389 = vmatmul.mubr.bf16.gmra.mxu0 %v1322
        %v1390 = vpop.f32.mrf.mxu0
        %v1391 = vadd.f32 %v1231, %v1390
        %v1392 = vpop.f32.mrf.mxu0
        %v1393 = vadd.f32 %v1231, %v1392
        %v1394 = vpop.f32.mrf.mxu0
        %v1395 = vadd.f32 %v1236, %v1394
        %v1396 = vpop.f32.mrf.mxu0
        %v1397 = vadd.f32 %v1236, %v1396
        %1398 = vmatprep.mubr.bf16.mxu0 0
        %1399 = vmatmul.mubr.bf16.gmra.mxu0 %v1323
        %v1400 = vpop.f32.mrf.mxu0
        %v1401 = vadd.f32 %v1241, %v1400
        %v1402 = vpop.f32.mrf.mxu0
        %v1403 = vadd.f32 %v1241, %v1402
        %v1404 = vpop.f32.mrf.mxu0
        %v1405 = vadd.f32 %v1246, %v1404
        %v1406 = vpop.f32.mrf.mxu0
        %v1407 = vadd.f32 %v1246, %v1406
        %1408 = vmatprep.mubr.bf16.mxu0 0
        %1409 = vmatmul.mubr.bf16.gmra.mxu0 %v1324
        %v1410 = vpop.f32.mrf.mxu0
        %v1411 = vadd.f32 %v1251, %v1410
        %v1412 = vpop.f32.mrf.mxu0
        %v1413 = vadd.f32 %v1251, %v1412
        %v1414 = vpop.f32.mrf.mxu0
        %v1415 = vadd.f32 %v1256, %v1414
        %v1416 = vpop.f32.mrf.mxu0
        %v1417 = vadd.f32 %v1256, %v1416
        %1418 = vmatprep.mubr.bf16.mxu0 0
        %1419 = vmatmul.mubr.bf16.gmra.mxu0 %v1325
        %v1420 = vpop.f32.mrf.mxu0
        %v1421 = vadd.f32 %v1261, %v1420
        %v1422 = vpop.f32.mrf.mxu0
        %v1423 = vadd.f32 %v1261, %v1422
        %v1424 = vpop.f32.mrf.mxu0
        %v1425 = vadd.f32 %v1266, %v1424
        %v1426 = vpop.f32.mrf.mxu0
        %v1427 = vadd.f32 %v1266, %v1426
        %1428 = vmatprep.mubr.bf16.mxu0 0
        %1429 = vmatmul.mubr.bf16.gmra.mxu0 %v1326
        %v1430 = vpop.f32.mrf.mxu0
        %v1431 = vadd.f32 %v1271, %v1430
        %v1432 = vpop.f32.mrf.mxu0
        %v1433 = vadd.f32 %v1271, %v1432
        %v1434 = vpop.f32.mrf.mxu0
        %v1435 = vadd.f32 %v1276, %v1434
        %v1436 = vpop.f32.mrf.mxu0
        %v1437 = vadd.f32 %v1276, %v1436
        %1438 = vmatprep.mubr.bf16.mxu0 0
        %1439 = vmatmul.mubr.bf16.gmra.mxu0 %v1327
        %v1440 = vpop.f32.mrf.mxu0
        %v1441 = vadd.f32 %v1281, %v1440
        %v1442 = vpop.f32.mrf.mxu0
        %v1443 = vadd.f32 %v1281, %v1442
        %v1444 = vpop.f32.mrf.mxu0
        %v1445 = vadd.f32 %v1286, %v1444
        %v1446 = vpop.f32.mrf.mxu0
        %v1447 = vadd.f32 %v1286, %v1446
        %1448 = vdwg.mxu0
        %v1449 = vmax.f32 %v1371, 0.0
        %v1450 = vmax.f32 %v1373, 0.0
        %v1451 = vmax.f32 %v1375, 0.0
        %v1452 = vmax.f32 %v1377, 0.0
        %v1453 = vmax.f32 %v1381, 0.0
        %v1454 = vmax.f32 %v1383, 0.0
        %v1455 = vmax.f32 %v1385, 0.0
        %v1456 = vmax.f32 %v1387, 0.0
        %v1457 = vmax.f32 %v1391, 0.0
        %v1458 = vmax.f32 %v1393, 0.0
        %v1459 = vmax.f32 %v1395, 0.0
        %v1460 = vmax.f32 %v1397, 0.0
        %v1461 = vmax.f32 %v1401, 0.0
        %v1462 = vmax.f32 %v1403, 0.0
        %v1463 = vmax.f32 %v1405, 0.0
        %v1464 = vmax.f32 %v1407, 0.0
        %v1465 = vmax.f32 %v1411, 0.0
        %v1466 = vmax.f32 %v1413, 0.0
        %v1467 = vmax.f32 %v1415, 0.0
        %v1468 = vmax.f32 %v1417, 0.0
        %v1469 = vmax.f32 %v1421, 0.0
        %v1470 = vmax.f32 %v1423, 0.0
        %v1471 = vmax.f32 %v1425, 0.0
        %v1472 = vmax.f32 %v1427, 0.0
        %v1473 = vmax.f32 %v1431, 0.0
        %v1474 = vmax.f32 %v1433, 0.0
        %v1475 = vmax.f32 %v1435, 0.0
        %v1476 = vmax.f32 %v1437, 0.0
        %v1477 = vmax.f32 %v1441, 0.0
        %v1478 = vmax.f32 %v1443, 0.0
        %v1479 = vmax.f32 %v1445, 0.0
        %v1480 = vmax.f32 %v1447, 0.0
        %v1481 = vld [vmem:[%s6] sm:$0xf]
        %v1482 = vld [vmem:[%s6 + $0x4] sm:$0xf]
        %v1483 = vld [vmem:[%s6 + $0x8] sm:$0xf]
        %v1484 = vld [vmem:[%s6 + $0xc] sm:$0xf]
        %v1485 = vld [vmem:[%s6 + $0x10] sm:$0xf]
        %v1486 = vld [vmem:[%s6 + $0x14] sm:$0xf]
        %v1487 = vld [vmem:[%s6 + $0x18] sm:$0xf]
        %v1488 = vld [vmem:[%s6 + $0x1c] sm:$0xf]
        %v1489 = vld [vmem:[%s6 + $0x20] sm:$0xf]
        %v1490 = vld [vmem:[%s6 + $0x24] sm:$0xf]
        %v1491 = vld [vmem:[%s6 + $0x28] sm:$0xf]
        %v1492 = vld [vmem:[%s6 + $0x2c] sm:$0xf]
        %v1493 = vld [vmem:[%s6 + $0x30] sm:$0xf]
        %v1494 = vld [vmem:[%s6 + $0x34] sm:$0xf]
        %v1495 = vld [vmem:[%s6 + $0x38] sm:$0xf]
        %v1496 = vld [vmem:[%s6 + $0x3c] sm:$0xf]
        %v1497 = vpack.c.bf16 %v1451, %v1449
        %v1498 = vpack.c.bf16 %v1452, %v1450
        %v1499 = vpack.c.bf16 %v1455, %v1453
        %v1500 = vpack.c.bf16 %v1456, %v1454
        %v1501 = vpack.c.bf16 %v1459, %v1457
        %v1502 = vpack.c.bf16 %v1460, %v1458
        %v1503 = vpack.c.bf16 %v1463, %v1461
        %v1504 = vpack.c.bf16 %v1464, %v1462
        %v1505 = vpack.c.bf16 %v1467, %v1465
        %v1506 = vpack.c.bf16 %v1468, %v1466
        %v1507 = vpack.c.bf16 %v1471, %v1469
        %v1508 = vpack.c.bf16 %v1472, %v1470
        %v1509 = vpack.c.bf16 %v1475, %v1473
        %v1510 = vpack.c.bf16 %v1476, %v1474
        %v1511 = vpack.c.bf16 %v1479, %v1477
        %v1512 = vpack.c.bf16 %v1480, %v1478
        %v1513 = vld [vmem:[%s7] sm:$0xff]
        %v1514 = vld [vmem:[%s7 + $0x8] sm:$0xff]
        %v1515 = vld [vmem:[%s7 + $0x10] sm:$0xff]
        %v1516 = vld [vmem:[%s7 + $0x18] sm:$0xff]
        %v1517 = vld [vmem:[%s7 + $0x20] sm:$0xff]
        %v1518 = vld [vmem:[%s7 + $0x28] sm:$0xff]
        %v1519 = vld [vmem:[%s7 + $0x30] sm:$0xff]
        %v1520 = vld [vmem:[%s7 + $0x38] sm:$0xff]
        %v1521 = vld [vmem:[%s7 + $0x40] sm:$0xff]
        %v1522 = vld [vmem:[%s7 + $0x48] sm:$0xff]
        %v1523 = vld [vmem:[%s7 + $0x50] sm:$0xff]
        %v1524 = vld [vmem:[%s7 + $0x58] sm:$0xff]
        %v1525 = vld [vmem:[%s7 + $0x60] sm:$0xff]
        %v1526 = vld [vmem:[%s7 + $0x68] sm:$0xff]
        %v1527 = vld [vmem:[%s7 + $0x70] sm:$0xff]
        %v1528 = vld [vmem:[%s7 + $0x78] sm:$0xff]
        %1530 = vset.pattern.permute.xlu0 0
        %1531 = vperm.xlu0 %1530, %v1513
        %v1532 = vpop.permute.xlu0 %1531
        %1535 = vset.pattern.permute.xlu0 0
        %1536 = vperm.xlu0 %1535, %v1514
        %v1537 = vpop.permute.xlu0 %1536
        %1540 = vset.pattern.permute.xlu0 0
        %1541 = vperm.xlu0 %1540, %v1515
        %v1542 = vpop.permute.xlu0 %1541
        %1545 = vset.pattern.permute.xlu0 0
        %1546 = vperm.xlu0 %1545, %v1516
        %v1547 = vpop.permute.xlu0 %1546
        %1550 = vset.pattern.permute.xlu0 0
        %1551 = vperm.xlu0 %1550, %v1517
        %v1552 = vpop.permute.xlu0 %1551
        %1555 = vset.pattern.permute.xlu0 0
        %1556 = vperm.xlu0 %1555, %v1518
        %v1557 = vpop.permute.xlu0 %1556
        %1560 = vset.pattern.permute.xlu0 0
        %1561 = vperm.xlu0 %1560, %v1519
        %v1562 = vpop.permute.xlu0 %1561
        %1565 = vset.pattern.permute.xlu0 0
        %1566 = vperm.xlu0 %1565, %v1520
        %v1567 = vpop.permute.xlu0 %1566
        %1570 = vset.pattern.permute.xlu0 0
        %1571 = vperm.xlu0 %1570, %v1521
        %v1572 = vpop.permute.xlu0 %1571
        %1575 = vset.pattern.permute.xlu0 0
        %1576 = vperm.xlu0 %1575, %v1522
        %v1577 = vpop.permute.xlu0 %1576
        %1580 = vset.pattern.permute.xlu0 0
        %1581 = vperm.xlu0 %1580, %v1523
        %v1582 = vpop.permute.xlu0 %1581
        %1585 = vset.pattern.permute.xlu0 0
        %1586 = vperm.xlu0 %1585, %v1524
        %v1587 = vpop.permute.xlu0 %1586
        %1590 = vset.pattern.permute.xlu0 0
        %1591 = vperm.xlu0 %1590, %v1525
        %v1592 = vpop.permute.xlu0 %1591
        %1595 = vset.pattern.permute.xlu0 0
        %1596 = vperm.xlu0 %1595, %v1526
        %v1597 = vpop.permute.xlu0 %1596
        %1600 = vset.pattern.permute.xlu0 0
        %1601 = vperm.xlu0 %1600, %v1527
        %v1602 = vpop.permute.xlu0 %1601
        %1605 = vset.pattern.permute.xlu0 0
        %1606 = vperm.xlu0 %1605, %v1528
        %v1607 = vpop.permute.xlu0 %1606
        %v1625 = vunpack.c.l.b16 %v1481
        %v1626 = vunpack.c.l.b16 %v1482
        %v1627 = vunpack.c.l.b16 %v1483
        %v1628 = vunpack.c.l.b16 %v1484
        %v1629 = vunpack.c.l.b16 %v1485
        %v1630 = vunpack.c.l.b16 %v1486
        %v1631 = vunpack.c.l.b16 %v1487
        %v1632 = vunpack.c.l.b16 %v1488
        %v1633 = vunpack.c.l.b16 %v1489
        %v1634 = vunpack.c.l.b16 %v1490
        %v1635 = vunpack.c.l.b16 %v1491
        %v1636 = vunpack.c.l.b16 %v1492
        %v1637 = vunpack.c.l.b16 %v1493
        %v1638 = vunpack.c.l.b16 %v1494
        %v1639 = vunpack.c.l.b16 %v1495
        %v1640 = vunpack.c.l.b16 %v1496
        %v1641 = vpack.c.b16 %v1626, %v1625
        %v1642 = vpack.c.b16 %v1628, %v1627
        %v1643 = vpack.c.b16 %v1630, %v1629
        %v1644 = vpack.c.b16 %v1632, %v1631
        %v1645 = vpack.c.b16 %v1634, %v1633
        %v1646 = vpack.c.b16 %v1636, %v1635
        %v1647 = vpack.c.b16 %v1638, %v1637
        %v1648 = vpack.c.b16 %v1640, %v1639
        %1657 = vmatprep.subr.bf16.mxu0 %v1512
        %1658 = vmatpush1.bf16.msra.mxu0 %v1511
        %1659 = vmatprep.subr.bf16.mxu0 %v1510
        %1660 = vmatpush1.bf16.msra.mxu0 %v1509
        %1661 = vmatprep.subr.bf16.mxu0 %v1508
        %1662 = vmatpush1.bf16.msra.mxu0 %v1507
        %1663 = vmatprep.subr.bf16.mxu0 %v1506
        %1664 = vmatpush1.bf16.msra.mxu0 %v1505
        %1665 = vmatprep.subr.bf16.mxu0 %v1504
        %1666 = vmatpush1.bf16.msra.mxu0 %v1503
        %1667 = vmatprep.subr.bf16.mxu0 %v1502
        %1668 = vmatpush1.bf16.msra.mxu0 %v1501
        %1669 = vmatprep.subr.bf16.mxu0 %v1500
        %1670 = vmatpush1.bf16.msra.mxu0 %v1499
        %1671 = vmatprep.subr.bf16.mxu0 %v1498
        %1672 = vmatpush1.bf16.msra.mxu0 %v1497
        %1673 = vmatprep.subr.bf16.mxu0 0
        %1674 = vmatpush2.bf16.msra.mxu0 0
        %1675 = vmatprep.subr.bf16.mxu0 0
        %1676 = vmatpush2.bf16.msra.mxu0 0
        %1677 = vmatprep.subr.bf16.mxu0 0
        %1678 = vmatpush2.bf16.msra.mxu0 0
        %1679 = vmatprep.subr.bf16.mxu0 0
        %1680 = vmatpush2.bf16.msra.mxu0 0
        %1681 = vmatprep.subr.bf16.mxu0 0
        %1682 = vmatpush2.bf16.msra.mxu0 0
        %1683 = vmatprep.subr.bf16.mxu0 0
        %1684 = vmatpush2.bf16.msra.mxu0 0
        %1685 = vmatprep.subr.bf16.mxu0 0
        %1686 = vmatpush2.bf16.msra.mxu0 0
        %1687 = vmatprep.subr.bf16.mxu0 0
        %1688 = vmatpush2.bf16.msra.mxu0 0
        %1689 = vmatprep.mubr.bf16.mxu0 0
        %1690 = vmatmul.mubr.bf16.gmra.mxu0 %v1641
        %v1691 = vpop.f32.mrf.mxu0
        %v1692 = vadd.f32 %v1532, %v1691
        %v1693 = vpop.f32.mrf.mxu0
        %v1694 = vadd.f32 %v1532, %v1693
        %v1695 = vpop.f32.mrf.mxu0
        %v1696 = vadd.f32 %v1537, %v1695
        %v1697 = vpop.f32.mrf.mxu0
        %v1698 = vadd.f32 %v1537, %v1697
        %1699 = vmatprep.mubr.bf16.mxu0 0
        %1700 = vmatmul.mubr.bf16.gmra.mxu0 %v1642
        %v1701 = vpop.f32.mrf.mxu0
        %v1702 = vadd.f32 %v1542, %v1701
        %v1703 = vpop.f32.mrf.mxu0
        %v1704 = vadd.f32 %v1542, %v1703
        %v1705 = vpop.f32.mrf.mxu0
        %v1706 = vadd.f32 %v1547, %v1705
        %v1707 = vpop.f32.mrf.mxu0
        %v1708 = vadd.f32 %v1547, %v1707
        %1709 = vmatprep.mubr.bf16.mxu0 0
        %1710 = vmatmul.mubr.bf16.gmra.mxu0 %v1643
        %v1711 = vpop.f32.mrf.mxu0
        %v1712 = vadd.f32 %v1552, %v1711
        %v1713 = vpop.f32.mrf.mxu0
        %v1714 = vadd.f32 %v1552, %v1713
        %v1715 = vpop.f32.mrf.mxu0
        %v1716 = vadd.f32 %v1557, %v1715
        %v1717 = vpop.f32.mrf.mxu0
        %v1718 = vadd.f32 %v1557, %v1717
        %1719 = vmatprep.mubr.bf16.mxu0 0
        %1720 = vmatmul.mubr.bf16.gmra.mxu0 %v1644
        %v1721 = vpop.f32.mrf.mxu0
        %v1722 = vadd.f32 %v1562, %v1721
        %v1723 = vpop.f32.mrf.mxu0
        %v1724 = vadd.f32 %v1562, %v1723
        %v1725 = vpop.f32.mrf.mxu0
        %v1726 = vadd.f32 %v1567, %v1725
        %v1727 = vpop.f32.mrf.mxu0
        %v1728 = vadd.f32 %v1567, %v1727
        %1729 = vmatprep.mubr.bf16.mxu0 0
        %1730 = vmatmul.mubr.bf16.gmra.mxu0 %v1645
        %v1731 = vpop.f32.mrf.mxu0
        %v1732 = vadd.f32 %v1572, %v1731
        %v1733 = vpop.f32.mrf.mxu0
        %v1734 = vadd.f32 %v1572, %v1733
        %v1735 = vpop.f32.mrf.mxu0
        %v1736 = vadd.f32 %v1577, %v1735
        %v1737 = vpop.f32.mrf.mxu0
        %v1738 = vadd.f32 %v1577, %v1737
        %1739 = vmatprep.mubr.bf16.mxu0 0
        %1740 = vmatmul.mubr.bf16.gmra.mxu0 %v1646
        %v1741 = vpop.f32.mrf.mxu0
        %v1742 = vadd.f32 %v1582, %v1741
        %v1743 = vpop.f32.mrf.mxu0
        %v1744 = vadd.f32 %v1582, %v1743
        %v1745 = vpop.f32.mrf.mxu0
        %v1746 = vadd.f32 %v1587, %v1745
        %v1747 = vpop.f32.mrf.mxu0
        %v1748 = vadd.f32 %v1587, %v1747
        %1749 = vmatprep.mubr.bf16.mxu0 0
        %1750 = vmatmul.mubr.bf16.gmra.mxu0 %v1647
        %v1751 = vpop.f32.mrf.mxu0
        %v1752 = vadd.f32 %v1592, %v1751
        %v1753 = vpop.f32.mrf.mxu0
        %v1754 = vadd.f32 %v1592, %v1753
        %v1755 = vpop.f32.mrf.mxu0
        %v1756 = vadd.f32 %v1597, %v1755
        %v1757 = vpop.f32.mrf.mxu0
        %v1758 = vadd.f32 %v1597, %v1757
        %1759 = vmatprep.mubr.bf16.mxu0 0
        %1760 = vmatmul.mubr.bf16.gmra.mxu0 %v1648
        %v1761 = vpop.f32.mrf.mxu0
        %v1762 = vadd.f32 %v1602, %v1761
        %v1763 = vpop.f32.mrf.mxu0
        %v1764 = vadd.f32 %v1602, %v1763
        %v1765 = vpop.f32.mrf.mxu0
        %v1766 = vadd.f32 %v1607, %v1765
        %v1767 = vpop.f32.mrf.mxu0
        %v1768 = vadd.f32 %v1607, %v1767
        %1769 = vdwg.mxu0
        %v1770 = vmax.f32 %v1692, 0.0
        %v1771 = vmax.f32 %v1694, 0.0
        %v1772 = vmax.f32 %v1696, 0.0
        %v1773 = vmax.f32 %v1698, 0.0
        %v1774 = vmax.f32 %v1702, 0.0
        %v1775 = vmax.f32 %v1704, 0.0
        %v1776 = vmax.f32 %v1706, 0.0
        %v1777 = vmax.f32 %v1708, 0.0
        %v1778 = vmax.f32 %v1712, 0.0
        %v1779 = vmax.f32 %v1714, 0.0
        %v1780 = vmax.f32 %v1716, 0.0
        %v1781 = vmax.f32 %v1718, 0.0
        %v1782 = vmax.f32 %v1722, 0.0
        %v1783 = vmax.f32 %v1724, 0.0
        %v1784 = vmax.f32 %v1726, 0.0
        %v1785 = vmax.f32 %v1728, 0.0
        %v1786 = vmax.f32 %v1732, 0.0
        %v1787 = vmax.f32 %v1734, 0.0
        %v1788 = vmax.f32 %v1736, 0.0
        %v1789 = vmax.f32 %v1738, 0.0
        %v1790 = vmax.f32 %v1742, 0.0
        %v1791 = vmax.f32 %v1744, 0.0
        %v1792 = vmax.f32 %v1746, 0.0
        %v1793 = vmax.f32 %v1748, 0.0
        %v1794 = vmax.f32 %v1752, 0.0
        %v1795 = vmax.f32 %v1754, 0.0
        %v1796 = vmax.f32 %v1756, 0.0
        %v1797 = vmax.f32 %v1758, 0.0
        %v1798 = vmax.f32 %v1762, 0.0
        %v1799 = vmax.f32 %v1764, 0.0
        %v1800 = vmax.f32 %v1766, 0.0
        %v1801 = vmax.f32 %v1768, 0.0
        %v1802 = vld [vmem:[%s8] sm:$0xff]
        %v1803 = vld [vmem:[%s8 + $0x8] sm:$0xff]
        %v1804 = vld [vmem:[%s8 + $0x10] sm:$0xff]
        %v1805 = vld [vmem:[%s8 + $0x18] sm:$0xff]
        %v1806 = vld [vmem:[%s8 + $0x20] sm:$0xff]
        %v1807 = vld [vmem:[%s8 + $0x28] sm:$0xff]
        %v1808 = vld [vmem:[%s8 + $0x30] sm:$0xff]
        %v1809 = vld [vmem:[%s8 + $0x38] sm:$0xff]
        %v1810 = vld [vmem:[%s8 + $0x40] sm:$0xff]
        %v1811 = vld [vmem:[%s8 + $0x48] sm:$0xff]
        %v1812 = vld [vmem:[%s8 + $0x50] sm:$0xff]
        %v1813 = vld [vmem:[%s8 + $0x58] sm:$0xff]
        %v1814 = vld [vmem:[%s8 + $0x60] sm:$0xff]
        %v1815 = vld [vmem:[%s8 + $0x68] sm:$0xff]
        %v1816 = vld [vmem:[%s8 + $0x70] sm:$0xff]
        %v1817 = vld [vmem:[%s8 + $0x78] sm:$0xff]
        %1819 = vset.pattern.permute.xlu0 0
        %1820 = vperm.xlu0 %1819, %v1802
        %v1821 = vpop.permute.xlu0 %1820
        %1824 = vset.pattern.permute.xlu0 0
        %1825 = vperm.xlu0 %1824, %v1803
        %v1826 = vpop.permute.xlu0 %1825
        %1829 = vset.pattern.permute.xlu0 0
        %1830 = vperm.xlu0 %1829, %v1804
        %v1831 = vpop.permute.xlu0 %1830
        %1834 = vset.pattern.permute.xlu0 0
        %1835 = vperm.xlu0 %1834, %v1805
        %v1836 = vpop.permute.xlu0 %1835
        %1839 = vset.pattern.permute.xlu0 0
        %1840 = vperm.xlu0 %1839, %v1806
        %v1841 = vpop.permute.xlu0 %1840
        %1844 = vset.pattern.permute.xlu0 0
        %1845 = vperm.xlu0 %1844, %v1807
        %v1846 = vpop.permute.xlu0 %1845
        %1849 = vset.pattern.permute.xlu0 0
        %1850 = vperm.xlu0 %1849, %v1808
        %v1851 = vpop.permute.xlu0 %1850
        %1854 = vset.pattern.permute.xlu0 0
        %1855 = vperm.xlu0 %1854, %v1809
        %v1856 = vpop.permute.xlu0 %1855
        %1859 = vset.pattern.permute.xlu0 0
        %1860 = vperm.xlu0 %1859, %v1810
        %v1861 = vpop.permute.xlu0 %1860
        %1864 = vset.pattern.permute.xlu0 0
        %1865 = vperm.xlu0 %1864, %v1811
        %v1866 = vpop.permute.xlu0 %1865
        %1869 = vset.pattern.permute.xlu0 0
        %1870 = vperm.xlu0 %1869, %v1812
        %v1871 = vpop.permute.xlu0 %1870
        %1874 = vset.pattern.permute.xlu0 0
        %1875 = vperm.xlu0 %1874, %v1813
        %v1876 = vpop.permute.xlu0 %1875
        %1879 = vset.pattern.permute.xlu0 0
        %1880 = vperm.xlu0 %1879, %v1814
        %v1881 = vpop.permute.xlu0 %1880
        %1884 = vset.pattern.permute.xlu0 0
        %1885 = vperm.xlu0 %1884, %v1815
        %v1886 = vpop.permute.xlu0 %1885
        %1889 = vset.pattern.permute.xlu0 0
        %1890 = vperm.xlu0 %1889, %v1816
        %v1891 = vpop.permute.xlu0 %1890
        %1894 = vset.pattern.permute.xlu0 0
        %1895 = vperm.xlu0 %1894, %v1817
        %v1896 = vpop.permute.xlu0 %1895
        %v1898 = vmul.f32 %v1821, %v1770
        %v1899 = vmul.f32 %v1821, %v1771
        %v1900 = vmul.f32 %v1826, %v1772
        %v1901 = vmul.f32 %v1826, %v1773
        %v1902 = vmul.f32 %v1831, %v1774
        %v1903 = vmul.f32 %v1831, %v1775
        %v1904 = vmul.f32 %v1836, %v1776
        %v1905 = vmul.f32 %v1836, %v1777
        %v1906 = vmul.f32 %v1841, %v1778
        %v1907 = vmul.f32 %v1841, %v1779
        %v1908 = vmul.f32 %v1846, %v1780
        %v1909 = vmul.f32 %v1846, %v1781
        %v1910 = vmul.f32 %v1851, %v1782
        %v1911 = vmul.f32 %v1851, %v1783
        %v1912 = vmul.f32 %v1856, %v1784
        %v1913 = vmul.f32 %v1856, %v1785
        %v1914 = vmul.f32 %v1861, %v1786
        %v1915 = vmul.f32 %v1861, %v1787
        %v1916 = vmul.f32 %v1866, %v1788
        %v1917 = vmul.f32 %v1866, %v1789
        %v1918 = vmul.f32 %v1871, %v1790
        %v1919 = vmul.f32 %v1871, %v1791
        %v1920 = vmul.f32 %v1876, %v1792
        %v1921 = vmul.f32 %v1876, %v1793
        %v1922 = vmul.f32 %v1881, %v1794
        %v1923 = vmul.f32 %v1881, %v1795
        %v1924 = vmul.f32 %v1886, %v1796
        %v1925 = vmul.f32 %v1886, %v1797
        %v1926 = vmul.f32 %v1891, %v1798
        %v1927 = vmul.f32 %v1891, %v1799
        %v1928 = vmul.f32 %v1896, %v1800
        %v1929 = vmul.f32 %v1896, %v1801
        %v1930 = vadd.f32 %v1898, %v1900
        %v1931 = vadd.f32 %v1930, %v1902
        %v1932 = vadd.f32 %v1931, %v1904
        %v1933 = vadd.f32 %v1932, %v1906
        %v1934 = vadd.f32 %v1933, %v1908
        %v1935 = vadd.f32 %v1934, %v1910
        %v1936 = vadd.f32 %v1935, %v1912
        %v1937 = vadd.f32 %v1936, %v1914
        %v1938 = vadd.f32 %v1937, %v1916
        %v1939 = vadd.f32 %v1938, %v1918
        %v1940 = vadd.f32 %v1939, %v1920
        %v1941 = vadd.f32 %v1940, %v1922
        %v1942 = vadd.f32 %v1941, %v1924
        %v1943 = vadd.f32 %v1942, %v1926
        %v1944 = vadd.f32 %v1943, %v1928
        %v1945 = vrot.slane %v1944, 4
        %v1946 = vadd.f32 %v1944, %v1945
        %v1947 = vrot.slane %v1946, 2
        %v1948 = vadd.f32 %v1946, %v1947
        %v1949 = vrot.slane %v1948, 1
        %v1950 = vadd.f32 %v1948, %v1949
        %v1951 = vadd.f32 %v1899, %v1901
        %v1952 = vadd.f32 %v1951, %v1903
        %v1953 = vadd.f32 %v1952, %v1905
        %v1954 = vadd.f32 %v1953, %v1907
        %v1955 = vadd.f32 %v1954, %v1909
        %v1956 = vadd.f32 %v1955, %v1911
        %v1957 = vadd.f32 %v1956, %v1913
        %v1958 = vadd.f32 %v1957, %v1915
        %v1959 = vadd.f32 %v1958, %v1917
        %v1960 = vadd.f32 %v1959, %v1919
        %v1961 = vadd.f32 %v1960, %v1921
        %v1962 = vadd.f32 %v1961, %v1923
        %v1963 = vadd.f32 %v1962, %v1925
        %v1964 = vadd.f32 %v1963, %v1927
        %v1965 = vadd.f32 %v1964, %v1929
        %v1966 = vrot.slane %v1965, 4
        %v1967 = vadd.f32 %v1965, %v1966
        %v1968 = vrot.slane %v1967, 2
        %v1969 = vadd.f32 %v1967, %v1968
        %v1970 = vrot.slane %v1969, 1
        %v1971 = vadd.f32 %v1969, %v1970
        %v1972 = vld [vmem:[#allocation2] sm:$0x1]
        %1974 = vset.pattern.permute.xlu0 0
        %1975 = vperm.xlu0 %1974, %v1972
        %v1976 = vpop.permute.xlu0 %1975
        %v1978 = vlaneseq
        %v1979 = vshrl.u32 %v1978, 7
        %v1980 = vsub.s32 0, %v1979
        %v1981 = vrot.slane %v1976, %v1980
        %v1982 = vadd.f32 %v1950, %v1981
        %v1983 = vadd.f32 %v1971, %v1981
        %s1984 = sld [smem:[#allocation3]]
        %s1985 = sld [smem:[#allocation3 + $0x1]]
        %v1986 = vtanh.pop %v1982
        %v1987 = vtanh.pop %v1983
        %v1988 = vstv %s1984
        %v1989 = vmul.f32 %v1986, %v1988
        %v1990 = vmul.f32 %v1987, %v1988
        %v1991 = vstv %s1985
        %v1992 = vadd.f32 %v1989, %v1991
        %v1993 = vadd.f32 %v1990, %v1991
        %v1996 = vcombine.low %v1992, %v1993
        %v1998 = vunpack.c.l.s4 1966171168
        %v1999 = vunpack.c.0.s8 %v1998
        %v2000 = vlaneseq
        %v2001 = vshrl.u32 %v2000, 7
        %v2002 = vsub.s32 %v1999, %v2001
        %v2003 = vrot.slane %v1996, %v2002
        %v2005 = vunpack.c.l.s4 1966171168
        %v2006 = vunpack.c.0.s8 %v2005
        %v2007 = vlaneseq
        %v2008 = vshrl.u32 %v2007, 7
        %v2009 = vsub.s32 %v2006, %v2008
        %v2010 = vrot.slane %v2003, %v2009
        %v2012 = vlaneseq
        %vm2013 = vcmp.ge.s32.totalorder %v2012, 0
        %vm2014 = vcmp.lt.s32.totalorder %v2012, 256
        %vm2015 = vmand %vm2013, %vm2014
        %2016 = vst.msk [vmem:[%s411] sm:$0x3] %vm2015, %v2010
        %s2017 = smul.u32 2, %s29
        %p2018 = scmp.lt.s32.totalorder %s28, 1
        %s2019 = scalar_select %p2018, %s28, 1
        %p2020 = scmp.lt.s32.totalorder %s2017, 1
        %s2021 = scalar_select %p2020, %s2017, 1
        %s2022 = smul.addr %s2019, 2
        %s2023 = sadd.s32 %s2021, %s2022
        %s2024 = scalar_lea.vmem %s10, %s2023
        // Predicated region
        $region65: #{pixelnn_forward.1} parent=59 // pred_check
          %p2025 = pneg %p273
        $region66: #{pixelnn_forward.1} parent=59 // pred_check_branch
          %2027 = sbr.rel (%p2025) target = $region68
        $region67: #{pixelnn_forward.1} parent=59 // pred_region
          %s2028 = smul.u32 2, %s29
        $region68: #{pixelnn_forward.1} parent=59 // pred_fallthru
          _
      $region60: #{pixelnn_forward.1} parent=5 // pred_fallthru
        _
      %p2029 = scmp.le.s32.totalorder 2, %s19
      // Predicated region
      $region69: #{pixelnn_forward.1} parent=5 // pred_check
        %p2030 = pneg %p2029
      $region70: #{pixelnn_forward.1} parent=5 // pred_check_branch
        %2032 = sbr.rel (%p2030) target = $region72
      $region71: #{pixelnn_forward.1} parent=5 // pred_region
        %s2033 = ssub.s32 %s19, 2
        // Predicated region
        $region73: #{pixelnn_forward.1} parent=71 // pred_check
          %p2034 = pneg %p279
        $region74: #{pixelnn_forward.1} parent=71 // pred_check_branch
          %2036 = sbr.rel (%p2034) target = $region76
        $region75: #{pixelnn_forward.1} parent=71 // pred_region
          %s2037 = smul.u32 2, %s31
          %p2038 = scmp.lt.s32.totalorder %s30, 1
          %s2039 = scalar_select %p2038, %s30, 1
          %p2040 = scmp.lt.s32.totalorder %s2037, 1
          %s2041 = scalar_select %p2040, %s2037, 1
          %s2042 = smul.addr %s2039, 2
          %s2043 = sadd.s32 %s2041, %s2042
          %s2044 = scalar_lea.vmem %s10, %s2043
        $region76: #{pixelnn_forward.1} parent=71 // pred_fallthru
          _
      $region72: #{pixelnn_forward.1} parent=5 // pred_fallthru
        _
    $region6: #{pixelnn_forward.1} parent=1 // loop_footer
      %s23 = sadd.s32 1, %s19
    $region7: #{pixelnn_forward.1} parent=1 // loop_footer_branch
      %18 = sbr.rel target = $region3
    $region8: #{pixelnn_forward.1} parent=1 // loop_exit
      _
    %2045 = vsyncpa [#allocation4], 1
    %s2046 = scalar_lea.sflag [#allocation4], 1
    %2047 = vsyncpa %s2046, 1

</llo_original>
